<compile_context>
chip_gen: v6e
topology: v6e:2x2x1
jax: 0.10.0
libtpu: 0.0.40
codegen_flags: <defaults>
</compile_context>

<pallas_src>
import functools

import jax
import jax.numpy as jnp
from jax.experimental import pallas as pl
from jax.experimental.pallas import tpu as pltpu


def _round_up(x: int, m: int) -> int:
    return (x + m - 1) // m * m


# ----------------------------- Fused RNN recurrence + per-step output Linear -----------------------------
def fused_rnn_kernel(z_ref, h0_ref, whh_t_ref, wout_t_ref, bout_ref,
                     logits_ref, hN_ref):
    """Single grid point.

    z_ref      : (T, Bp, Hp)  hoisted input contribution  W_ih^T[tok] + b_ih + b_hh
    h0_ref     : (Bp, Hp)     initial hidden state
    whh_t_ref  : (Hp, Hp)     W_hh^T (zero-padded)
    wout_t_ref : (Hp, Vp)     W_out^T (zero-padded)
    bout_ref   : (1, Vp)      output bias
    logits_ref : (T*Bp, Vp)   fused Linear output (lane-dense, written per step)
    hN_ref     : (Bp, Hp)     final hidden state
    """
    T, Bp, Hp = z_ref.shape
    Vp = wout_t_ref.shape[1]

    # Hoist all loop-invariant operands once (incl. the bias broadcast — JAX does
    # not CSE broadcast_in_dim, so do NOT rebuild it per iteration).
    whh_t = whh_t_ref[...]                                   # (Hp, Hp) resident
    wout_t = wout_t_ref[...]                                 # (Hp, Vp) resident
    bout = jnp.broadcast_to(bout_ref[...], (Bp, Vp))         # (Bp, Vp)

    h = h0_ref[...]                                          # (Bp, Hp)

    # Serial recurrence, fully unrolled (T is a static Python int -> static,
    # sublane-aligned 8-row slices into logits_ref). The projection matmul each
    # step is independent of the h chain, so it fills the MXU latency bubbles
    # of the dependent (8,128)@(128,128) recurrence matmuls.
    for t in range(T):
        h = jnp.tanh(
            z_ref[t]
            + jnp.dot(h, whh_t, preferred_element_type=jnp.float32))
        logits_ref[t * Bp:(t + 1) * Bp, :] = (
            jnp.dot(h, wout_t, preferred_element_type=jnp.float32) + bout)

    hN_ref[...] = h                                          # final hidden state


# ----------------------------- One-time parameter layout / padding -----------------------------
def prepare_padded_params(params, vocab_size):
    """Pad/transpose weights once (outside the per-call forward).

    Folds both RNN biases into the embedding rows so the per-call work is just a
    token-row gather. All padded lanes/rows are exact zeros (required so padded
    hidden lanes stay zero through tanh and both matmuls).
    """
    H = params["w_hh"].shape[0]
    V = vocab_size
    Hp = _round_up(H, 128)    # lane alignment
    Vp = _round_up(V, 128)    # lane alignment

    # one_hot(tok, V) @ W_ih^T == W_ih^T[tok]; fold b_ih + b_hh into each row.
    emb = params["w_ih"].T + (params["b_ih"] + params["b_hh"])           # (V, H)

    return {
        "emb": jnp.zeros((V, Hp), jnp.float32).at[:, :H].set(emb),
        "whh_t": jnp.zeros((Hp, Hp), jnp.float32).at[:H, :H].set(params["w_hh"].T),
        "wout_t": jnp.zeros((Hp, Vp), jnp.float32).at[:H, :V].set(params["w_out"].T),
        "bout": jnp.zeros((1, Vp), jnp.float32).at[0, :V].set(params["b_out"]),
    }


# ----------------------------- Full model forward -----------------------------
@functools.partial(jax.jit, static_argnames=("vocab_size", "hidden_size"))
def rnn_model_forward(inputs, state, padded, vocab_size, hidden_size):
    """inputs: (B, T) int32 token ids; state: (1, B, H); padded: prepare_padded_params(...).
    Returns (logits (T*B, V), new_state (1, B, H)) — same as the PyTorch forward."""
    B, T = inputs.shape
    H, V = hidden_size, vocab_size
    Hp = padded["whh_t"].shape[0]
    Vp = padded["wout_t"].shape[1]
    Bp = _round_up(B, 8)      # f32 sublane alignment

    # Per-call input-side contribution: embedding-row gather (no one-hot, no x matmul,
    # biases already folded in, hidden lanes already padded). Only pad the batch dim.
    z = padded["emb"][inputs.T]                                           # (T, B, Hp)
    z_p = jnp.zeros((T, Bp, Hp), jnp.float32).at[:, :B, :].set(z)
    h0_p = jnp.zeros((Bp, Hp), jnp.float32).at[:B, :H].set(state[0])

    grid_spec = pltpu.PrefetchScalarGridSpec(
        num_scalar_prefetch=0,
        grid=(1,),                                   # single program: no per-step grid overhead
        in_specs=[
            pl.BlockSpec((T, Bp, Hp), lambda i: (0, 0, 0)),   # Z
            pl.BlockSpec((Bp, Hp), lambda i: (0, 0)),         # h0
            pl.BlockSpec((Hp, Hp), lambda i: (0, 0)),         # W_hh^T
            pl.BlockSpec((Hp, Vp), lambda i: (0, 0)),         # W_out^T
            pl.BlockSpec((1, Vp), lambda i: (0, 0)),          # b_out
        ],
        out_specs=[
            pl.BlockSpec((T * Bp, Vp), lambda i: (0, 0)),     # logits (lane-dense)
            pl.BlockSpec((Bp, Hp), lambda i: (0, 0)),         # h_N
        ],
    )

    logits_p, hN_p = pl.pallas_call(
        fused_rnn_kernel,
        out_shape=(
            jax.ShapeDtypeStruct((T * Bp, Vp), jnp.float32),
            jax.ShapeDtypeStruct((Bp, Hp), jnp.float32),
        ),
        grid_spec=grid_spec,
        compiler_params=pltpu.CompilerParams(
            dimension_semantics=("arbitrary",)),     # recurrence is inherently serial
    )(z_p, h0_p, padded["whh_t"], padded["wout_t"], padded["bout"])

    # Strip padding; row ordering matches y.reshape(-1, H) (row = t*B + b).
    logits = logits_p.reshape(T, Bp, Vp)[:, :B, :V].reshape(T * B, V)
    new_state = hN_p[:B, :H][None]
    return logits, new_state


# ----------------------------- Pure-JAX reference (mirrors the PyTorch forward) -----------------------------
def reference_forward(inputs, state, params, vocab_size):
    x = jax.nn.one_hot(inputs.T, vocab_size, dtype=jnp.float32)         # (T, B, V)
    xw = jnp.einsum("tbv,hv->tbh", x, params["w_ih"],
                    precision=jax.lax.Precision.HIGHEST)                # (T, B, H)
    h = state[0]
    ys = []
    for t in range(x.shape[0]):
        h = jnp.tanh(xw[t] + params["b_ih"]
                     + h @ params["w_hh"].T + params["b_hh"])
        ys.append(h)
    y = jnp.stack(ys, axis=0)
    logits = y.reshape(-1, y.shape[-1]) @ params["w_out"].T + params["b_out"]
    return logits, h[None]


if __name__ == "__main__":
    # Small shapes consistent with the module's forward.
    batch = 2
    seq = 8
    vocab = 32       # vocab_size (one-hot width == linear output width)
    hidden = 32      # rnn.hidden_size

    key = jax.random.PRNGKey(0)
    k_in, k1, k2, k3, k4, k5, k6 = jax.random.split(key, 7)

    # Deterministic parameter init (PyTorch-style uniform(-1/sqrt(H), 1/sqrt(H))).
    bound = 1.0 / jnp.sqrt(jnp.float32(hidden))
    params = {
        "w_ih": jax.random.uniform(k1, (hidden, vocab), jnp.float32, -bound, bound),
        "w_hh": jax.random.uniform(k2, (hidden, hidden), jnp.float32, -bound, bound),
        "b_ih": jax.random.uniform(k3, (hidden,), jnp.float32, -bound, bound),
        "b_hh": jax.random.uniform(k4, (hidden,), jnp.float32, -bound, bound),
        "w_out": jax.random.uniform(k5, (vocab, hidden), jnp.float32, -bound, bound),
        "b_out": jax.random.uniform(k6, (vocab,), jnp.float32, -bound, bound),
    }

    inputs = jax.random.randint(k_in, (batch, seq), 0, vocab, dtype=jnp.int32)
    state = jnp.zeros((1, batch, hidden), jnp.float32)   # begin_state()

    # One-time weight layout work (padding / transpose / bias fold) outside the forward.
    padded = jax.block_until_ready(prepare_padded_params(params, vocab))

    logits, new_state = rnn_model_forward(inputs, state, padded, vocab, hidden)
    jax.block_until_ready((logits, new_state))

    # Silent correctness check against the pure-JAX reference.
    ref_logits, ref_state = reference_forward(inputs, state, params, vocab)
    assert logits.shape == (seq * batch, vocab)
    assert new_state.shape == (1, batch, hidden)
    assert jnp.allclose(logits, ref_logits, atol=1e-5, rtol=1e-5)
    assert jnp.allclose(new_state, ref_state, atol=1e-5, rtol=1e-5)

    print("KERNEL_OK")
</pallas_src>

<mosaic_0001>
module attributes {stable_mosaic.version = 11 : i64} {
  func.func @fused_rnn_kernel(%arg0: i32, %arg1: memref<8x8x128xf32, #tpu.memory_space<vmem>>, %arg2: memref<8x128xf32, #tpu.memory_space<vmem>>, %arg3: memref<128x128xf32, #tpu.memory_space<vmem>>, %arg4: memref<128x128xf32, #tpu.memory_space<vmem>>, %arg5: memref<1x128xf32, #tpu.memory_space<vmem>>, %arg6: memref<64x128xf32, #tpu.memory_space<vmem>>, %arg7: memref<8x128xf32, #tpu.memory_space<vmem>>) attributes {dimension_semantics = [#tpu.dimension_semantics<arbitrary>], iteration_bounds = array<i64: 1>, scalar_prefetch = 0 : i64, scratch_operands = 0 : i64, tpu.core_type = #tpu.core_type<tc>, window_params = [{pipeline_mode = #tpu.pipeline_mode<synchronous>, transform_indices = @transform_0, window_bounds = array<i64: 8, 8, 128>}, {pipeline_mode = #tpu.pipeline_mode<synchronous>, transform_indices = @transform_1, window_bounds = array<i64: 8, 128>}, {pipeline_mode = #tpu.pipeline_mode<synchronous>, transform_indices = @transform_2, window_bounds = array<i64: 128, 128>}, {pipeline_mode = #tpu.pipeline_mode<synchronous>, transform_indices = @transform_3, window_bounds = array<i64: 128, 128>}, {pipeline_mode = #tpu.pipeline_mode<synchronous>, transform_indices = @transform_4, window_bounds = array<i64: 1, 128>}, {pipeline_mode = #tpu.pipeline_mode<synchronous>, transform_indices = @transform_5, window_bounds = array<i64: 64, 128>}, {pipeline_mode = #tpu.pipeline_mode<synchronous>, transform_indices = @transform_6, window_bounds = array<i64: 8, 128>}]} {
    %c0 = arith.constant 0 : index
    %c0_0 = arith.constant 0 : index
    %0 = vector.load %arg3[%c0, %c0_0] : memref<128x128xf32, #tpu.memory_space<vmem>>, vector<128x128xf32>
    %c0_1 = arith.constant 0 : index
    %c0_2 = arith.constant 0 : index
    %1 = vector.load %arg4[%c0_1, %c0_2] : memref<128x128xf32, #tpu.memory_space<vmem>>, vector<128x128xf32>
    %c0_3 = arith.constant 0 : index
    %c0_4 = arith.constant 0 : index
    %2 = vector.load %arg5[%c0_3, %c0_4] : memref<1x128xf32, #tpu.memory_space<vmem>>, vector<1x128xf32>
    %3 = vector.shape_cast %2 : vector<1x128xf32> to vector<1x128xf32>
    %4 = vector.broadcast %3 : vector<1x128xf32> to vector<8x128xf32>
    %c0_5 = arith.constant 0 : index
    %c0_6 = arith.constant 0 : index
    %5 = vector.load %arg2[%c0_5, %c0_6] : memref<8x128xf32, #tpu.memory_space<vmem>>, vector<8x128xf32>
    %c0_7 = arith.constant 0 : index
    %c0_8 = arith.constant 0 : index
    %c0_9 = arith.constant 0 : index
    %6 = vector.load %arg1[%c0_7, %c0_8, %c0_9] : memref<8x8x128xf32, #tpu.memory_space<vmem>>, vector<1x8x128xf32>
    %7 = vector.shape_cast %6 : vector<1x8x128xf32> to vector<8x128xf32>
    %cst = arith.constant dense<0.000000e+00> : vector<8x128xf32>
    %8 = tpu.matmul %5, %0, %cst {dimension_numbers = #tpu.dot_dimension_numbers<[1], [0], [0], [1], [0, 0, 1, 1], [], []>} : vector<8x128xf32>, vector<128x128xf32>, vector<8x128xf32> -> vector<8x128xf32>
    %9 = arith.addf %7, %8 : vector<8x128xf32>
    %10 = math.tanh %9 : vector<8x128xf32>
    %cst_10 = arith.constant dense<0.000000e+00> : vector<8x128xf32>
    %11 = tpu.matmul %10, %1, %cst_10 {dimension_numbers = #tpu.dot_dimension_numbers<[1], [0], [0], [1], [0, 0, 1, 1], [], []>} : vector<8x128xf32>, vector<128x128xf32>, vector<8x128xf32> -> vector<8x128xf32>
    %12 = arith.addf %11, %4 : vector<8x128xf32>
    %c0_11 = arith.constant 0 : index
    %c0_12 = arith.constant 0 : index
    %13 = vector.load %arg6[%c0_11, %c0_12] : memref<64x128xf32, #tpu.memory_space<vmem>>, vector<8x128xf32>
    tpu.vector_store %arg6[%c0_11, %c0_12], %12 {strides = array<i32>} : memref<64x128xf32, #tpu.memory_space<vmem>>, vector<8x128xf32>,
    %c1 = arith.constant 1 : index
    %c0_13 = arith.constant 0 : index
    %c0_14 = arith.constant 0 : index
    %14 = vector.load %arg1[%c1, %c0_13, %c0_14] : memref<8x8x128xf32, #tpu.memory_space<vmem>>, vector<1x8x128xf32>
    %15 = vector.shape_cast %14 : vector<1x8x128xf32> to vector<8x128xf32>
    %cst_15 = arith.constant dense<0.000000e+00> : vector<8x128xf32>
    %16 = tpu.matmul %10, %0, %cst_15 {dimension_numbers = #tpu.dot_dimension_numbers<[1], [0], [0], [1], [0, 0, 1, 1], [], []>} : vector<8x128xf32>, vector<128x128xf32>, vector<8x128xf32> -> vector<8x128xf32>
    %17 = arith.addf %15, %16 : vector<8x128xf32>
    %18 = math.tanh %17 : vector<8x128xf32>
    %cst_16 = arith.constant dense<0.000000e+00> : vector<8x128xf32>
    %19 = tpu.matmul %18, %1, %cst_16 {dimension_numbers = #tpu.dot_dimension_numbers<[1], [0], [0], [1], [0, 0, 1, 1], [], []>} : vector<8x128xf32>, vector<128x128xf32>, vector<8x128xf32> -> vector<8x128xf32>
    %20 = arith.addf %19, %4 : vector<8x128xf32>
    %c8 = arith.constant 8 : index
    %c0_17 = arith.constant 0 : index
    %21 = vector.load %arg6[%c8, %c0_17] : memref<64x128xf32, #tpu.memory_space<vmem>>, vector<8x128xf32>
    tpu.vector_store %arg6[%c8, %c0_17], %20 {strides = array<i32>} : memref<64x128xf32, #tpu.memory_space<vmem>>, vector<8x128xf32>,
    %c2 = arith.constant 2 : index
    %c0_18 = arith.constant 0 : index
    %c0_19 = arith.constant 0 : index
    %22 = vector.load %arg1[%c2, %c0_18, %c0_19] : memref<8x8x128xf32, #tpu.memory_space<vmem>>, vector<1x8x128xf32>
    %23 = vector.shape_cast %22 : vector<1x8x128xf32> to vector<8x128xf32>
    %cst_20 = arith.constant dense<0.000000e+00> : vector<8x128xf32>
    %24 = tpu.matmul %18, %0, %cst_20 {dimension_numbers = #tpu.dot_dimension_numbers<[1], [0], [0], [1], [0, 0, 1, 1], [], []>} : vector<8x128xf32>, vector<128x128xf32>, vector<8x128xf32> -> vector<8x128xf32>
    %25 = arith.addf %23, %24 : vector<8x128xf32>
    %26 = math.tanh %25 : vector<8x128xf32>
    %cst_21 = arith.constant dense<0.000000e+00> : vector<8x128xf32>
    %27 = tpu.matmul %26, %1, %cst_21 {dimension_numbers = #tpu.dot_dimension_numbers<[1], [0], [0], [1], [0, 0, 1, 1], [], []>} : vector<8x128xf32>, vector<128x128xf32>, vector<8x128xf32> -> vector<8x128xf32>
    %28 = arith.addf %27, %4 : vector<8x128xf32>
    %c16 = arith.constant 16 : index
    %c0_22 = arith.constant 0 : index
    %29 = vector.load %arg6[%c16, %c0_22] : memref<64x128xf32, #tpu.memory_space<vmem>>, vector<8x128xf32>
    tpu.vector_store %arg6[%c16, %c0_22], %28 {strides = array<i32>} : memref<64x128xf32, #tpu.memory_space<vmem>>, vector<8x128xf32>,
    %c3 = arith.constant 3 : index
    %c0_23 = arith.constant 0 : index
    %c0_24 = arith.constant 0 : index
    %30 = vector.load %arg1[%c3, %c0_23, %c0_24] : memref<8x8x128xf32, #tpu.memory_space<vmem>>, vector<1x8x128xf32>
    %31 = vector.shape_cast %30 : vector<1x8x128xf32> to vector<8x128xf32>
    %cst_25 = arith.constant dense<0.000000e+00> : vector<8x128xf32>
    %32 = tpu.matmul %26, %0, %cst_25 {dimension_numbers = #tpu.dot_dimension_numbers<[1], [0], [0], [1], [0, 0, 1, 1], [], []>} : vector<8x128xf32>, vector<128x128xf32>, vector<8x128xf32> -> vector<8x128xf32>
    %33 = arith.addf %31, %32 : vector<8x128xf32>
    %34 = math.tanh %33 : vector<8x128xf32>
    %cst_26 = arith.constant dense<0.000000e+00> : vector<8x128xf32>
    %35 = tpu.matmul %34, %1, %cst_26 {dimension_numbers = #tpu.dot_dimension_numbers<[1], [0], [0], [1], [0, 0, 1, 1], [], []>} : vector<8x128xf32>, vector<128x128xf32>, vector<8x128xf32> -> vector<8x128xf32>
    %36 = arith.addf %35, %4 : vector<8x128xf32>
    %c24 = arith.constant 24 : index
    %c0_27 = arith.constant 0 : index
    %37 = vector.load %arg6[%c24, %c0_27] : memref<64x128xf32, #tpu.memory_space<vmem>>, vector<8x128xf32>
    tpu.vector_store %arg6[%c24, %c0_27], %36 {strides = array<i32>} : memref<64x128xf32, #tpu.memory_space<vmem>>, vector<8x128xf32>,
    %c4 = arith.constant 4 : index
    %c0_28 = arith.constant 0 : index
    %c0_29 = arith.constant 0 : index
    %38 = vector.load %arg1[%c4, %c0_28, %c0_29] : memref<8x8x128xf32, #tpu.memory_space<vmem>>, vector<1x8x128xf32>
    %39 = vector.shape_cast %38 : vector<1x8x128xf32> to vector<8x128xf32>
    %cst_30 = arith.constant dense<0.000000e+00> : vector<8x128xf32>
    %40 = tpu.matmul %34, %0, %cst_30 {dimension_numbers = #tpu.dot_dimension_numbers<[1], [0], [0], [1], [0, 0, 1, 1], [], []>} : vector<8x128xf32>, vector<128x128xf32>, vector<8x128xf32> -> vector<8x128xf32>
    %41 = arith.addf %39, %40 : vector<8x128xf32>
    %42 = math.tanh %41 : vector<8x128xf32>
    %cst_31 = arith.constant dense<0.000000e+00> : vector<8x128xf32>
    %43 = tpu.matmul %42, %1, %cst_31 {dimension_numbers = #tpu.dot_dimension_numbers<[1], [0], [0], [1], [0, 0, 1, 1], [], []>} : vector<8x128xf32>, vector<128x128xf32>, vector<8x128xf32> -> vector<8x128xf32>
    %44 = arith.addf %43, %4 : vector<8x128xf32>
    %c32 = arith.constant 32 : index
    %c0_32 = arith.constant 0 : index
    %45 = vector.load %arg6[%c32, %c0_32] : memref<64x128xf32, #tpu.memory_space<vmem>>, vector<8x128xf32>
    tpu.vector_store %arg6[%c32, %c0_32], %44 {strides = array<i32>} : memref<64x128xf32, #tpu.memory_space<vmem>>, vector<8x128xf32>,
    %c5 = arith.constant 5 : index
    %c0_33 = arith.constant 0 : index
    %c0_34 = arith.constant 0 : index
    %46 = vector.load %arg1[%c5, %c0_33, %c0_34] : memref<8x8x128xf32, #tpu.memory_space<vmem>>, vector<1x8x128xf32>
    %47 = vector.shape_cast %46 : vector<1x8x128xf32> to vector<8x128xf32>
    %cst_35 = arith.constant dense<0.000000e+00> : vector<8x128xf32>
    %48 = tpu.matmul %42, %0, %cst_35 {dimension_numbers = #tpu.dot_dimension_numbers<[1], [0], [0], [1], [0, 0, 1, 1], [], []>} : vector<8x128xf32>, vector<128x128xf32>, vector<8x128xf32> -> vector<8x128xf32>
    %49 = arith.addf %47, %48 : vector<8x128xf32>
    %50 = math.tanh %49 : vector<8x128xf32>
    %cst_36 = arith.constant dense<0.000000e+00> : vector<8x128xf32>
    %51 = tpu.matmul %50, %1, %cst_36 {dimension_numbers = #tpu.dot_dimension_numbers<[1], [0], [0], [1], [0, 0, 1, 1], [], []>} : vector<8x128xf32>, vector<128x128xf32>, vector<8x128xf32> -> vector<8x128xf32>
    %52 = arith.addf %51, %4 : vector<8x128xf32>
    %c40 = arith.constant 40 : index
    %c0_37 = arith.constant 0 : index
    %53 = vector.load %arg6[%c40, %c0_37] : memref<64x128xf32, #tpu.memory_space<vmem>>, vector<8x128xf32>
    tpu.vector_store %arg6[%c40, %c0_37], %52 {strides = array<i32>} : memref<64x128xf32, #tpu.memory_space<vmem>>, vector<8x128xf32>,
    %c6 = arith.constant 6 : index
    %c0_38 = arith.constant 0 : index
    %c0_39 = arith.constant 0 : index
    %54 = vector.load %arg1[%c6, %c0_38, %c0_39] : memref<8x8x128xf32, #tpu.memory_space<vmem>>, vector<1x8x128xf32>
    %55 = vector.shape_cast %54 : vector<1x8x128xf32> to vector<8x128xf32>
    %cst_40 = arith.constant dense<0.000000e+00> : vector<8x128xf32>
    %56 = tpu.matmul %50, %0, %cst_40 {dimension_numbers = #tpu.dot_dimension_numbers<[1], [0], [0], [1], [0, 0, 1, 1], [], []>} : vector<8x128xf32>, vector<128x128xf32>, vector<8x128xf32> -> vector<8x128xf32>
    %57 = arith.addf %55, %56 : vector<8x128xf32>
    %58 = math.tanh %57 : vector<8x128xf32>
    %cst_41 = arith.constant dense<0.000000e+00> : vector<8x128xf32>
    %59 = tpu.matmul %58, %1, %cst_41 {dimension_numbers = #tpu.dot_dimension_numbers<[1], [0], [0], [1], [0, 0, 1, 1], [], []>} : vector<8x128xf32>, vector<128x128xf32>, vector<8x128xf32> -> vector<8x128xf32>
    %60 = arith.addf %59, %4 : vector<8x128xf32>
    %c48 = arith.constant 48 : index
    %c0_42 = arith.constant 0 : index
    %61 = vector.load %arg6[%c48, %c0_42] : memref<64x128xf32, #tpu.memory_space<vmem>>, vector<8x128xf32>
    tpu.vector_store %arg6[%c48, %c0_42], %60 {strides = array<i32>} : memref<64x128xf32, #tpu.memory_space<vmem>>, vector<8x128xf32>,
    %c7 = arith.constant 7 : index
    %c0_43 = arith.constant 0 : index
    %c0_44 = arith.constant 0 : index
    %62 = vector.load %arg1[%c7, %c0_43, %c0_44] : memref<8x8x128xf32, #tpu.memory_space<vmem>>, vector<1x8x128xf32>
    %63 = vector.shape_cast %62 : vector<1x8x128xf32> to vector<8x128xf32>
    %cst_45 = arith.constant dense<0.000000e+00> : vector<8x128xf32>
    %64 = tpu.matmul %58, %0, %cst_45 {dimension_numbers = #tpu.dot_dimension_numbers<[1], [0], [0], [1], [0, 0, 1, 1], [], []>} : vector<8x128xf32>, vector<128x128xf32>, vector<8x128xf32> -> vector<8x128xf32>
    %65 = arith.addf %63, %64 : vector<8x128xf32>
    %66 = math.tanh %65 : vector<8x128xf32>
    %cst_46 = arith.constant dense<0.000000e+00> : vector<8x128xf32>
    %67 = tpu.matmul %66, %1, %cst_46 {dimension_numbers = #tpu.dot_dimension_numbers<[1], [0], [0], [1], [0, 0, 1, 1], [], []>} : vector<8x128xf32>, vector<128x128xf32>, vector<8x128xf32> -> vector<8x128xf32>
    %68 = arith.addf %67, %4 : vector<8x128xf32>
    %c56 = arith.constant 56 : index
    %c0_47 = arith.constant 0 : index
    %69 = vector.load %arg6[%c56, %c0_47] : memref<64x128xf32, #tpu.memory_space<vmem>>, vector<8x128xf32>
    tpu.vector_store %arg6[%c56, %c0_47], %68 {strides = array<i32>} : memref<64x128xf32, #tpu.memory_space<vmem>>, vector<8x128xf32>,
    %c0_48 = arith.constant 0 : index
    %c0_49 = arith.constant 0 : index
    %70 = vector.load %arg7[%c0_48, %c0_49] : memref<8x128xf32, #tpu.memory_space<vmem>>, vector<8x128xf32>
    tpu.vector_store %arg7[%c0_48, %c0_49], %66 {strides = array<i32>} : memref<8x128xf32, #tpu.memory_space<vmem>>, vector<8x128xf32>,
    return
  }
  func.func @transform_0(%arg0: i32) -> (i32, i32, i32) {
    %c0_i32 = arith.constant 0 : i32
    %c0_i32_0 = arith.constant 0 : i32
    %c0_i32_1 = arith.constant 0 : i32
    %c0_i32_2 = arith.constant 0 : i32
    return %c0_i32, %c0_i32_0, %c0_i32_1 : i32, i32, i32
  }
  func.func @transform_1(%arg0: i32) -> (i32, i32) {
    %c0_i32 = arith.constant 0 : i32
    %c0_i32_0 = arith.constant 0 : i32
    %c0_i32_1 = arith.constant 0 : i32
    return %c0_i32, %c0_i32_0 : i32, i32
  }
  func.func @transform_2(%arg0: i32) -> (i32, i32) {
    %c0_i32 = arith.constant 0 : i32
    %c0_i32_0 = arith.constant 0 : i32
    %c0_i32_1 = arith.constant 0 : i32
    return %c0_i32, %c0_i32_0 : i32, i32
  }
  func.func @transform_3(%arg0: i32) -> (i32, i32) {
    %c0_i32 = arith.constant 0 : i32
    %c0_i32_0 = arith.constant 0 : i32
    %c0_i32_1 = arith.constant 0 : i32
    return %c0_i32, %c0_i32_0 : i32, i32
  }
  func.func @transform_4(%arg0: i32) -> (i32, i32) {
    %c0_i32 = arith.constant 0 : i32
    %c0_i32_0 = arith.constant 0 : i32
    %c0_i32_1 = arith.constant 0 : i32
    return %c0_i32, %c0_i32_0 : i32, i32
  }
  func.func @transform_5(%arg0: i32) -> (i32, i32) {
    %c0_i32 = arith.constant 0 : i32
    %c0_i32_0 = arith.constant 0 : i32
    %c0_i32_1 = arith.constant 0 : i32
    return %c0_i32, %c0_i32_0 : i32, i32
  }
  func.func @transform_6(%arg0: i32) -> (i32, i32) {
    %c0_i32 = arith.constant 0 : i32
    %c0_i32_0 = arith.constant 0 : i32
    %c0_i32_1 = arith.constant 0 : i32
    return %c0_i32, %c0_i32_0 : i32, i32
  }
}

</mosaic_0001>

<llo_original>
// kernel: rnn_model_forward.1
$region0: #{rnn_model_forward.1}
  #allocation0 [shape = 'u32[]', space=smem, size = 0x4, offset = 0x4, fixed_abs, tag = 'smem constant byte address 0x4 - core index']
  #allocation1 [shape = 'u32[144,128]{1,0:T(1,128)}', space=vmem, size = 0x12000, scoped, tag = 'internal scratch']
  %s0 = inlined_call_operand.vmem [shape: f32[8,8,128], index: 0, kind: input, shape index: {}]
  %s1 = inlined_call_operand.vmem [shape: f32[8,128], index: 1, kind: input, shape index: {}]
  %s2 = inlined_call_operand.vmem [shape: f32[128,128], index: 2, kind: input, shape index: {}]
  %s3 = inlined_call_operand.vmem [shape: f32[128,128], index: 3, kind: input, shape index: {}]
  %s4 = inlined_call_operand.vmem [shape: f32[1,128], index: 4, kind: input, shape index: {}]
  %s5 = inlined_call_operand.vmem [shape: f32[64,128], index: 5, kind: output, shape index: {0}]
  %s6 = inlined_call_operand.vmem [shape: f32[8,128], index: 6, kind: output, shape index: {1}]
  %7 = xla_tuple %s5, %s6
  %s8 = sld [smem:[#allocation0]]
  $region38: #{rnn_model_forward.1} parent=0
    _
  %s10 = ssub.s32 1, %s8
  %s11 = scalar_select 0, %s10, %s8
  // Predicated region
  $region2: #{rnn_model_forward.1} parent=0 // pred_check
    _
  $region3: #{rnn_model_forward.1} parent=0 // pred_check_branch
    %13 = sbr.rel (0) target = $region5
  $region4: #{rnn_model_forward.1} parent=0 // pred_region
    _
  $region5: #{rnn_model_forward.1} parent=0 // pred_fallthru
    _
  // Predicated region
  $region6: #{rnn_model_forward.1} parent=0 // pred_check
    _
  $region7: #{rnn_model_forward.1} parent=0 // pred_check_branch
    %15 = sbr.rel (0) target = $region9
  $region8: #{rnn_model_forward.1} parent=0 // pred_region
    _
  $region9: #{rnn_model_forward.1} parent=0 // pred_fallthru
    _
  // Predicated region
  $region10: #{rnn_model_forward.1} parent=0 // pred_check
    _
  $region11: #{rnn_model_forward.1} parent=0 // pred_check_branch
    %17 = sbr.rel (0) target = $region13
  $region12: #{rnn_model_forward.1} parent=0 // pred_region
    _
  $region13: #{rnn_model_forward.1} parent=0 // pred_fallthru
    _
  // Predicated region
  $region14: #{rnn_model_forward.1} parent=0 // pred_check
    _
  $region15: #{rnn_model_forward.1} parent=0 // pred_check_branch
    %19 = sbr.rel (0) target = $region17
  $region16: #{rnn_model_forward.1} parent=0 // pred_region
    _
  $region17: #{rnn_model_forward.1} parent=0 // pred_fallthru
    _
  // Predicated region
  $region18: #{rnn_model_forward.1} parent=0 // pred_check
    _
  $region19: #{rnn_model_forward.1} parent=0 // pred_check_branch
    %21 = sbr.rel (0) target = $region21
  $region20: #{rnn_model_forward.1} parent=0 // pred_region
    _
  $region21: #{rnn_model_forward.1} parent=0 // pred_fallthru
    _
  %v22 = vld [vmem:[%s2] sm:$0xff]
  %v23 = vld [vmem:[%s2 + $0x8] sm:$0xff]
  %v24 = vld [vmem:[%s2 + $0x10] sm:$0xff]
  %v25 = vld [vmem:[%s2 + $0x18] sm:$0xff]
  %v26 = vld [vmem:[%s2 + $0x20] sm:$0xff]
  %v27 = vld [vmem:[%s2 + $0x28] sm:$0xff]
  %v28 = vld [vmem:[%s2 + $0x30] sm:$0xff]
  %v29 = vld [vmem:[%s2 + $0x38] sm:$0xff]
  %v30 = vld [vmem:[%s2 + $0x40] sm:$0xff]
  %v31 = vld [vmem:[%s2 + $0x48] sm:$0xff]
  %v32 = vld [vmem:[%s2 + $0x50] sm:$0xff]
  %v33 = vld [vmem:[%s2 + $0x58] sm:$0xff]
  %v34 = vld [vmem:[%s2 + $0x60] sm:$0xff]
  %v35 = vld [vmem:[%s2 + $0x68] sm:$0xff]
  %v36 = vld [vmem:[%s2 + $0x70] sm:$0xff]
  %v37 = vld [vmem:[%s2 + $0x78] sm:$0xff]
  %v38 = vld [vmem:[%s3] sm:$0xff]
  %v39 = vld [vmem:[%s3 + $0x8] sm:$0xff]
  %v40 = vld [vmem:[%s3 + $0x10] sm:$0xff]
  %v41 = vld [vmem:[%s3 + $0x18] sm:$0xff]
  %v42 = vld [vmem:[%s3 + $0x20] sm:$0xff]
  %v43 = vld [vmem:[%s3 + $0x28] sm:$0xff]
  %v44 = vld [vmem:[%s3 + $0x30] sm:$0xff]
  %v45 = vld [vmem:[%s3 + $0x38] sm:$0xff]
  %v46 = vld [vmem:[%s3 + $0x40] sm:$0xff]
  %v47 = vld [vmem:[%s3 + $0x48] sm:$0xff]
  %v48 = vld [vmem:[%s3 + $0x50] sm:$0xff]
  %v49 = vld [vmem:[%s3 + $0x58] sm:$0xff]
  %v50 = vld [vmem:[%s3 + $0x60] sm:$0xff]
  %v51 = vld [vmem:[%s3 + $0x68] sm:$0xff]
  %v52 = vld [vmem:[%s3 + $0x70] sm:$0xff]
  %v53 = vld [vmem:[%s3 + $0x78] sm:$0xff]
  %v54 = vld [vmem:[%s4] sm:$0x1]
  %v56 = vlaneseq
  %v57 = vshrl.u32 %v56, 7
  %v58 = vsub.s32 0, %v57
  %v59 = vrot.slane %v54, %v58
  %v61 = vld [vmem:[%s1] sm:$0xff]
  %v62 = vld [vmem:[%s0] sm:$0xff]
  %63 = vmatprep.subr.mxu0 0.0
  %64 = vmatpush1.msra.mxu0 %v37
  %65 = vmatprep.subr.mxu0 0.0
  %66 = vmatpush1.msra.mxu0 %v36
  %67 = vmatprep.subr.mxu0 0.0
  %68 = vmatpush1.msra.mxu0 %v35
  %69 = vmatprep.subr.mxu0 0.0
  %70 = vmatpush1.msra.mxu0 %v34
  %71 = vmatprep.subr.mxu0 0.0
  %72 = vmatpush1.msra.mxu0 %v33
  %73 = vmatprep.subr.mxu0 0.0
  %74 = vmatpush1.msra.mxu0 %v32
  %75 = vmatprep.subr.mxu0 0.0
  %76 = vmatpush1.msra.mxu0 %v31
  %77 = vmatprep.subr.mxu0 0.0
  %78 = vmatpush1.msra.mxu0 %v30
  %79 = vmatprep.subr.mxu0 0.0
  %80 = vmatpush1.msra.mxu0 %v29
  %81 = vmatprep.subr.mxu0 0.0
  %82 = vmatpush1.msra.mxu0 %v28
  %83 = vmatprep.subr.mxu0 0.0
  %84 = vmatpush1.msra.mxu0 %v27
  %85 = vmatprep.subr.mxu0 0.0
  %86 = vmatpush1.msra.mxu0 %v26
  %87 = vmatprep.subr.mxu0 0.0
  %88 = vmatpush1.msra.mxu0 %v25
  %89 = vmatprep.subr.mxu0 0.0
  %90 = vmatpush1.msra.mxu0 %v24
  %91 = vmatprep.subr.mxu0 0.0
  %92 = vmatpush1.msra.mxu0 %v23
  %93 = vmatprep.subr.mxu0 0.0
  %94 = vmatpush1.msra.mxu0 %v22
  %95 = vmatprep.subr.mxu0 0.0
  %96 = vmatpush2.msra.mxu0 0.0
  %97 = vmatprep.subr.mxu0 0.0
  %98 = vmatpush2.msra.mxu0 0.0
  %99 = vmatprep.subr.mxu0 0.0
  %100 = vmatpush2.msra.mxu0 0.0
  %101 = vmatprep.subr.mxu0 0.0
  %102 = vmatpush2.msra.mxu0 0.0
  %103 = vmatprep.subr.mxu0 0.0
  %104 = vmatpush2.msra.mxu0 0.0
  %105 = vmatprep.subr.mxu0 0.0
  %106 = vmatpush2.msra.mxu0 0.0
  %107 = vmatprep.subr.mxu0 0.0
  %108 = vmatpush2.msra.mxu0 0.0
  %109 = vmatprep.subr.mxu0 0.0
  %110 = vmatpush2.msra.mxu0 0.0
  %111 = vmatprep.subr.mxu0 0.0
  %112 = vmatpush2.msra.mxu0 0.0
  %113 = vmatprep.subr.mxu0 0.0
  %114 = vmatpush2.msra.mxu0 0.0
  %115 = vmatprep.subr.mxu0 0.0
  %116 = vmatpush2.msra.mxu0 0.0
  %117 = vmatprep.subr.mxu0 0.0
  %118 = vmatpush2.msra.mxu0 0.0
  %119 = vmatprep.subr.mxu0 0.0
  %120 = vmatpush2.msra.mxu0 0.0
  %121 = vmatprep.subr.mxu0 0.0
  %122 = vmatpush2.msra.mxu0 0.0
  %123 = vmatprep.subr.mxu0 0.0
  %124 = vmatpush2.msra.mxu0 0.0
  %125 = vmatprep.subr.mxu0 0.0
  %126 = vmatpush2.msra.mxu0 0.0
  %127 = vmatprep.mubr.f32.mxu0 0.0
  %128 = vmatmul.mubr.f32.gmra.mxu0 %v61
  %v129 = vpop.f32.mrf.mxu0
  %v130 = vadd.f32 0.0, %v129
  %v131 = vpop.f32.mrf.mxu0
  %132 = vdwg.mxu0
  %v133 = vadd.f32 %v62, %v130
  %v134 = vtanh.pop %v133
  %135 = vmatprep.subr.mxu0 0.0
  %136 = vmatpush1.msra.mxu0 %v53
  %137 = vmatprep.subr.mxu0 0.0
  %138 = vmatpush1.msra.mxu0 %v52
  %139 = vmatprep.subr.mxu0 0.0
  %140 = vmatpush1.msra.mxu0 %v51
  %141 = vmatprep.subr.mxu0 0.0
  %142 = vmatpush1.msra.mxu0 %v50
  %143 = vmatprep.subr.mxu0 0.0
  %144 = vmatpush1.msra.mxu0 %v49
  %145 = vmatprep.subr.mxu0 0.0
  %146 = vmatpush1.msra.mxu0 %v48
  %147 = vmatprep.subr.mxu0 0.0
  %148 = vmatpush1.msra.mxu0 %v47
  %149 = vmatprep.subr.mxu0 0.0
  %150 = vmatpush1.msra.mxu0 %v46
  %151 = vmatprep.subr.mxu0 0.0
  %152 = vmatpush1.msra.mxu0 %v45
  %153 = vmatprep.subr.mxu0 0.0
  %154 = vmatpush1.msra.mxu0 %v44
  %155 = vmatprep.subr.mxu0 0.0
  %156 = vmatpush1.msra.mxu0 %v43
  %157 = vmatprep.subr.mxu0 0.0
  %158 = vmatpush1.msra.mxu0 %v42
  %159 = vmatprep.subr.mxu0 0.0
  %160 = vmatpush1.msra.mxu0 %v41
  %161 = vmatprep.subr.mxu0 0.0
  %162 = vmatpush1.msra.mxu0 %v40
  %163 = vmatprep.subr.mxu0 0.0
  %164 = vmatpush1.msra.mxu0 %v39
  %165 = vmatprep.subr.mxu0 0.0
  %166 = vmatpush1.msra.mxu0 %v38
  %167 = vmatprep.subr.mxu0 0.0
  %168 = vmatpush2.msra.mxu0 0.0
  %169 = vmatprep.subr.mxu0 0.0
  %170 = vmatpush2.msra.mxu0 0.0
  %171 = vmatprep.subr.mxu0 0.0
  %172 = vmatpush2.msra.mxu0 0.0
  %173 = vmatprep.subr.mxu0 0.0
  %174 = vmatpush2.msra.mxu0 0.0
  %175 = vmatprep.subr.mxu0 0.0
  %176 = vmatpush2.msra.mxu0 0.0
  %177 = vmatprep.subr.mxu0 0.0
  %178 = vmatpush2.msra.mxu0 0.0
  %179 = vmatprep.subr.mxu0 0.0
  %180 = vmatpush2.msra.mxu0 0.0
  %181 = vmatprep.subr.mxu0 0.0
  %182 = vmatpush2.msra.mxu0 0.0
  %183 = vmatprep.subr.mxu0 0.0
  %184 = vmatpush2.msra.mxu0 0.0
  %185 = vmatprep.subr.mxu0 0.0
  %186 = vmatpush2.msra.mxu0 0.0
  %187 = vmatprep.subr.mxu0 0.0
  %188 = vmatpush2.msra.mxu0 0.0
  %189 = vmatprep.subr.mxu0 0.0
  %190 = vmatpush2.msra.mxu0 0.0
  %191 = vmatprep.subr.mxu0 0.0
  %192 = vmatpush2.msra.mxu0 0.0
  %193 = vmatprep.subr.mxu0 0.0
  %194 = vmatpush2.msra.mxu0 0.0
  %195 = vmatprep.subr.mxu0 0.0
  %196 = vmatpush2.msra.mxu0 0.0
  %197 = vmatprep.subr.mxu0 0.0
  %198 = vmatpush2.msra.mxu0 0.0
  %199 = vmatprep.mubr.f32.mxu0 0.0
  %200 = vmatmul.mubr.f32.gmra.mxu0 %v134
  %v201 = vpop.f32.mrf.mxu0
  %v202 = vadd.f32 %v59, %v201
  %v203 = vpop.f32.mrf.mxu0
  %204 = vdwg.mxu0
  %205 = vst [vmem:[%s5] sm:$0xff] %v202
  %s206 = scalar_lea.vmem %s0, 8
  %v207 = vld [vmem:[%s206] sm:$0xff]
  %208 = vmatprep.subr.mxu0 0.0
  %209 = vmatpush1.msra.mxu0 %v37
  %210 = vmatprep.subr.mxu0 0.0
  %211 = vmatpush1.msra.mxu0 %v36
  %212 = vmatprep.subr.mxu0 0.0
  %213 = vmatpush1.msra.mxu0 %v35
  %214 = vmatprep.subr.mxu0 0.0
  %215 = vmatpush1.msra.mxu0 %v34
  %216 = vmatprep.subr.mxu0 0.0
  %217 = vmatpush1.msra.mxu0 %v33
  %218 = vmatprep.subr.mxu0 0.0
  %219 = vmatpush1.msra.mxu0 %v32
  %220 = vmatprep.subr.mxu0 0.0
  %221 = vmatpush1.msra.mxu0 %v31
  %222 = vmatprep.subr.mxu0 0.0
  %223 = vmatpush1.msra.mxu0 %v30
  %224 = vmatprep.subr.mxu0 0.0
  %225 = vmatpush1.msra.mxu0 %v29
  %226 = vmatprep.subr.mxu0 0.0
  %227 = vmatpush1.msra.mxu0 %v28
  %228 = vmatprep.subr.mxu0 0.0
  %229 = vmatpush1.msra.mxu0 %v27
  %230 = vmatprep.subr.mxu0 0.0
  %231 = vmatpush1.msra.mxu0 %v26
  %232 = vmatprep.subr.mxu0 0.0
  %233 = vmatpush1.msra.mxu0 %v25
  %234 = vmatprep.subr.mxu0 0.0
  %235 = vmatpush1.msra.mxu0 %v24
  %236 = vmatprep.subr.mxu0 0.0
  %237 = vmatpush1.msra.mxu0 %v23
  %238 = vmatprep.subr.mxu0 0.0
  %239 = vmatpush1.msra.mxu0 %v22
  %240 = vmatprep.subr.mxu0 0.0
  %241 = vmatpush2.msra.mxu0 0.0
  %242 = vmatprep.subr.mxu0 0.0
  %243 = vmatpush2.msra.mxu0 0.0
  %244 = vmatprep.subr.mxu0 0.0
  %245 = vmatpush2.msra.mxu0 0.0
  %246 = vmatprep.subr.mxu0 0.0
  %247 = vmatpush2.msra.mxu0 0.0
  %248 = vmatprep.subr.mxu0 0.0
  %249 = vmatpush2.msra.mxu0 0.0
  %250 = vmatprep.subr.mxu0 0.0
  %251 = vmatpush2.msra.mxu0 0.0
  %252 = vmatprep.subr.mxu0 0.0
  %253 = vmatpush2.msra.mxu0 0.0
  %254 = vmatprep.subr.mxu0 0.0
  %255 = vmatpush2.msra.mxu0 0.0
  %256 = vmatprep.subr.mxu0 0.0
  %257 = vmatpush2.msra.mxu0 0.0
  %258 = vmatprep.subr.mxu0 0.0
  %259 = vmatpush2.msra.mxu0 0.0
  %260 = vmatprep.subr.mxu0 0.0
  %261 = vmatpush2.msra.mxu0 0.0
  %262 = vmatprep.subr.mxu0 0.0
  %263 = vmatpush2.msra.mxu0 0.0
  %264 = vmatprep.subr.mxu0 0.0
  %265 = vmatpush2.msra.mxu0 0.0
  %266 = vmatprep.subr.mxu0 0.0
  %267 = vmatpush2.msra.mxu0 0.0
  %268 = vmatprep.subr.mxu0 0.0
  %269 = vmatpush2.msra.mxu0 0.0
  %270 = vmatprep.subr.mxu0 0.0
  %271 = vmatpush2.msra.mxu0 0.0
  %272 = vmatprep.mubr.f32.mxu0 0.0
  %273 = vmatmul.mubr.f32.gmra.mxu0 %v134
  %v274 = vpop.f32.mrf.mxu0
  %v275 = vadd.f32 0.0, %v274
  %v276 = vpop.f32.mrf.mxu0
  %277 = vdwg.mxu0
  %v278 = vadd.f32 %v207, %v275
  %v279 = vtanh.pop %v278
  %280 = vmatprep.subr.mxu0 0.0
  %281 = vmatpush1.msra.mxu0 %v53
  %282 = vmatprep.subr.mxu0 0.0
  %283 = vmatpush1.msra.mxu0 %v52
  %284 = vmatprep.subr.mxu0 0.0
  %285 = vmatpush1.msra.mxu0 %v51
  %286 = vmatprep.subr.mxu0 0.0
  %287 = vmatpush1.msra.mxu0 %v50
  %288 = vmatprep.subr.mxu0 0.0
  %289 = vmatpush1.msra.mxu0 %v49
  %290 = vmatprep.subr.mxu0 0.0
  %291 = vmatpush1.msra.mxu0 %v48
  %292 = vmatprep.subr.mxu0 0.0
  %293 = vmatpush1.msra.mxu0 %v47
  %294 = vmatprep.subr.mxu0 0.0
  %295 = vmatpush1.msra.mxu0 %v46
  %296 = vmatprep.subr.mxu0 0.0
  %297 = vmatpush1.msra.mxu0 %v45
  %298 = vmatprep.subr.mxu0 0.0
  %299 = vmatpush1.msra.mxu0 %v44
  %300 = vmatprep.subr.mxu0 0.0
  %301 = vmatpush1.msra.mxu0 %v43
  %302 = vmatprep.subr.mxu0 0.0
  %303 = vmatpush1.msra.mxu0 %v42
  %304 = vmatprep.subr.mxu0 0.0
  %305 = vmatpush1.msra.mxu0 %v41
  %306 = vmatprep.subr.mxu0 0.0
  %307 = vmatpush1.msra.mxu0 %v40
  %308 = vmatprep.subr.mxu0 0.0
  %309 = vmatpush1.msra.mxu0 %v39
  %310 = vmatprep.subr.mxu0 0.0
  %311 = vmatpush1.msra.mxu0 %v38
  %312 = vmatprep.subr.mxu0 0.0
  %313 = vmatpush2.msra.mxu0 0.0
  %314 = vmatprep.subr.mxu0 0.0
  %315 = vmatpush2.msra.mxu0 0.0
  %316 = vmatprep.subr.mxu0 0.0
  %317 = vmatpush2.msra.mxu0 0.0
  %318 = vmatprep.subr.mxu0 0.0
  %319 = vmatpush2.msra.mxu0 0.0
  %320 = vmatprep.subr.mxu0 0.0
  %321 = vmatpush2.msra.mxu0 0.0
  %322 = vmatprep.subr.mxu0 0.0
  %323 = vmatpush2.msra.mxu0 0.0
  %324 = vmatprep.subr.mxu0 0.0
  %325 = vmatpush2.msra.mxu0 0.0
  %326 = vmatprep.subr.mxu0 0.0
  %327 = vmatpush2.msra.mxu0 0.0
  %328 = vmatprep.subr.mxu0 0.0
  %329 = vmatpush2.msra.mxu0 0.0
  %330 = vmatprep.subr.mxu0 0.0
  %331 = vmatpush2.msra.mxu0 0.0
  %332 = vmatprep.subr.mxu0 0.0
  %333 = vmatpush2.msra.mxu0 0.0
  %334 = vmatprep.subr.mxu0 0.0
  %335 = vmatpush2.msra.mxu0 0.0
  %336 = vmatprep.subr.mxu0 0.0
  %337 = vmatpush2.msra.mxu0 0.0
  %338 = vmatprep.subr.mxu0 0.0
  %339 = vmatpush2.msra.mxu0 0.0
  %340 = vmatprep.subr.mxu0 0.0
  %341 = vmatpush2.msra.mxu0 0.0
  %342 = vmatprep.subr.mxu0 0.0
  %343 = vmatpush2.msra.mxu0 0.0
  %344 = vmatprep.mubr.f32.mxu0 0.0
  %345 = vmatmul.mubr.f32.gmra.mxu0 %v279
  %v346 = vpop.f32.mrf.mxu0
  %v347 = vadd.f32 %v59, %v346
  %v348 = vpop.f32.mrf.mxu0
  %349 = vdwg.mxu0
  %350 = vst [vmem:[%s5 + $0x8] sm:$0xff] %v347
  %s351 = scalar_lea.vmem %s0, 16
  %v352 = vld [vmem:[%s351] sm:$0xff]
  %353 = vmatprep.subr.mxu0 0.0
  %354 = vmatpush1.msra.mxu0 %v37
  %355 = vmatprep.subr.mxu0 0.0
  %356 = vmatpush1.msra.mxu0 %v36
  %357 = vmatprep.subr.mxu0 0.0
  %358 = vmatpush1.msra.mxu0 %v35
  %359 = vmatprep.subr.mxu0 0.0
  %360 = vmatpush1.msra.mxu0 %v34
  %361 = vmatprep.subr.mxu0 0.0
  %362 = vmatpush1.msra.mxu0 %v33
  %363 = vmatprep.subr.mxu0 0.0
  %364 = vmatpush1.msra.mxu0 %v32
  %365 = vmatprep.subr.mxu0 0.0
  %366 = vmatpush1.msra.mxu0 %v31
  %367 = vmatprep.subr.mxu0 0.0
  %368 = vmatpush1.msra.mxu0 %v30
  %369 = vmatprep.subr.mxu0 0.0
  %370 = vmatpush1.msra.mxu0 %v29
  %371 = vmatprep.subr.mxu0 0.0
  %372 = vmatpush1.msra.mxu0 %v28
  %373 = vmatprep.subr.mxu0 0.0
  %374 = vmatpush1.msra.mxu0 %v27
  %375 = vmatprep.subr.mxu0 0.0
  %376 = vmatpush1.msra.mxu0 %v26
  %377 = vmatprep.subr.mxu0 0.0
  %378 = vmatpush1.msra.mxu0 %v25
  %379 = vmatprep.subr.mxu0 0.0
  %380 = vmatpush1.msra.mxu0 %v24
  %381 = vmatprep.subr.mxu0 0.0
  %382 = vmatpush1.msra.mxu0 %v23
  %383 = vmatprep.subr.mxu0 0.0
  %384 = vmatpush1.msra.mxu0 %v22
  %385 = vmatprep.subr.mxu0 0.0
  %386 = vmatpush2.msra.mxu0 0.0
  %387 = vmatprep.subr.mxu0 0.0
  %388 = vmatpush2.msra.mxu0 0.0
  %389 = vmatprep.subr.mxu0 0.0
  %390 = vmatpush2.msra.mxu0 0.0
  %391 = vmatprep.subr.mxu0 0.0
  %392 = vmatpush2.msra.mxu0 0.0
  %393 = vmatprep.subr.mxu0 0.0
  %394 = vmatpush2.msra.mxu0 0.0
  %395 = vmatprep.subr.mxu0 0.0
  %396 = vmatpush2.msra.mxu0 0.0
  %397 = vmatprep.subr.mxu0 0.0
  %398 = vmatpush2.msra.mxu0 0.0
  %399 = vmatprep.subr.mxu0 0.0
  %400 = vmatpush2.msra.mxu0 0.0
  %401 = vmatprep.subr.mxu0 0.0
  %402 = vmatpush2.msra.mxu0 0.0
  %403 = vmatprep.subr.mxu0 0.0
  %404 = vmatpush2.msra.mxu0 0.0
  %405 = vmatprep.subr.mxu0 0.0
  %406 = vmatpush2.msra.mxu0 0.0
  %407 = vmatprep.subr.mxu0 0.0
  %408 = vmatpush2.msra.mxu0 0.0
  %409 = vmatprep.subr.mxu0 0.0
  %410 = vmatpush2.msra.mxu0 0.0
  %411 = vmatprep.subr.mxu0 0.0
  %412 = vmatpush2.msra.mxu0 0.0
  %413 = vmatprep.subr.mxu0 0.0
  %414 = vmatpush2.msra.mxu0 0.0
  %415 = vmatprep.subr.mxu0 0.0
  %416 = vmatpush2.msra.mxu0 0.0
  %417 = vmatprep.mubr.f32.mxu0 0.0
  %418 = vmatmul.mubr.f32.gmra.mxu0 %v279
  %v419 = vpop.f32.mrf.mxu0
  %v420 = vadd.f32 0.0, %v419
  %v421 = vpop.f32.mrf.mxu0
  %422 = vdwg.mxu0
  %v423 = vadd.f32 %v352, %v420
  %v424 = vtanh.pop %v423
  %425 = vmatprep.subr.mxu0 0.0
  %426 = vmatpush1.msra.mxu0 %v53
  %427 = vmatprep.subr.mxu0 0.0
  %428 = vmatpush1.msra.mxu0 %v52
  %429 = vmatprep.subr.mxu0 0.0
  %430 = vmatpush1.msra.mxu0 %v51
  %431 = vmatprep.subr.mxu0 0.0
  %432 = vmatpush1.msra.mxu0 %v50
  %433 = vmatprep.subr.mxu0 0.0
  %434 = vmatpush1.msra.mxu0 %v49
  %435 = vmatprep.subr.mxu0 0.0
  %436 = vmatpush1.msra.mxu0 %v48
  %437 = vmatprep.subr.mxu0 0.0
  %438 = vmatpush1.msra.mxu0 %v47
  %439 = vmatprep.subr.mxu0 0.0
  %440 = vmatpush1.msra.mxu0 %v46
  %441 = vmatprep.subr.mxu0 0.0
  %442 = vmatpush1.msra.mxu0 %v45
  %443 = vmatprep.subr.mxu0 0.0
  %444 = vmatpush1.msra.mxu0 %v44
  %445 = vmatprep.subr.mxu0 0.0
  %446 = vmatpush1.msra.mxu0 %v43
  %447 = vmatprep.subr.mxu0 0.0
  %448 = vmatpush1.msra.mxu0 %v42
  %449 = vmatprep.subr.mxu0 0.0
  %450 = vmatpush1.msra.mxu0 %v41
  %451 = vmatprep.subr.mxu0 0.0
  %452 = vmatpush1.msra.mxu0 %v40
  %453 = vmatprep.subr.mxu0 0.0
  %454 = vmatpush1.msra.mxu0 %v39
  %455 = vmatprep.subr.mxu0 0.0
  %456 = vmatpush1.msra.mxu0 %v38
  %457 = vmatprep.subr.mxu0 0.0
  %458 = vmatpush2.msra.mxu0 0.0
  %459 = vmatprep.subr.mxu0 0.0
  %460 = vmatpush2.msra.mxu0 0.0
  %461 = vmatprep.subr.mxu0 0.0
  %462 = vmatpush2.msra.mxu0 0.0
  %463 = vmatprep.subr.mxu0 0.0
  %464 = vmatpush2.msra.mxu0 0.0
  %465 = vmatprep.subr.mxu0 0.0
  %466 = vmatpush2.msra.mxu0 0.0
  %467 = vmatprep.subr.mxu0 0.0
  %468 = vmatpush2.msra.mxu0 0.0
  %469 = vmatprep.subr.mxu0 0.0
  %470 = vmatpush2.msra.mxu0 0.0
  %471 = vmatprep.subr.mxu0 0.0
  %472 = vmatpush2.msra.mxu0 0.0
  %473 = vmatprep.subr.mxu0 0.0
  %474 = vmatpush2.msra.mxu0 0.0
  %475 = vmatprep.subr.mxu0 0.0
  %476 = vmatpush2.msra.mxu0 0.0
  %477 = vmatprep.subr.mxu0 0.0
  %478 = vmatpush2.msra.mxu0 0.0
  %479 = vmatprep.subr.mxu0 0.0
  %480 = vmatpush2.msra.mxu0 0.0
  %481 = vmatprep.subr.mxu0 0.0
  %482 = vmatpush2.msra.mxu0 0.0
  %483 = vmatprep.subr.mxu0 0.0
  %484 = vmatpush2.msra.mxu0 0.0
  %485 = vmatprep.subr.mxu0 0.0
  %486 = vmatpush2.msra.mxu0 0.0
  %487 = vmatprep.subr.mxu0 0.0
  %488 = vmatpush2.msra.mxu0 0.0
  %489 = vmatprep.mubr.f32.mxu0 0.0
  %490 = vmatmul.mubr.f32.gmra.mxu0 %v424
  %v491 = vpop.f32.mrf.mxu0
  %v492 = vadd.f32 %v59, %v491
  %v493 = vpop.f32.mrf.mxu0
  %494 = vdwg.mxu0
  %495 = vst [vmem:[%s5 + $0x10] sm:$0xff] %v492
  %s496 = scalar_lea.vmem %s0, 24
  %v497 = vld [vmem:[%s496] sm:$0xff]
  %498 = vmatprep.subr.mxu0 0.0
  %499 = vmatpush1.msra.mxu0 %v37
  %500 = vmatprep.subr.mxu0 0.0
  %501 = vmatpush1.msra.mxu0 %v36
  %502 = vmatprep.subr.mxu0 0.0
  %503 = vmatpush1.msra.mxu0 %v35
  %504 = vmatprep.subr.mxu0 0.0
  %505 = vmatpush1.msra.mxu0 %v34
  %506 = vmatprep.subr.mxu0 0.0
  %507 = vmatpush1.msra.mxu0 %v33
  %508 = vmatprep.subr.mxu0 0.0
  %509 = vmatpush1.msra.mxu0 %v32
  %510 = vmatprep.subr.mxu0 0.0
  %511 = vmatpush1.msra.mxu0 %v31
  %512 = vmatprep.subr.mxu0 0.0
  %513 = vmatpush1.msra.mxu0 %v30
  %514 = vmatprep.subr.mxu0 0.0
  %515 = vmatpush1.msra.mxu0 %v29
  %516 = vmatprep.subr.mxu0 0.0
  %517 = vmatpush1.msra.mxu0 %v28
  %518 = vmatprep.subr.mxu0 0.0
  %519 = vmatpush1.msra.mxu0 %v27
  %520 = vmatprep.subr.mxu0 0.0
  %521 = vmatpush1.msra.mxu0 %v26
  %522 = vmatprep.subr.mxu0 0.0
  %523 = vmatpush1.msra.mxu0 %v25
  %524 = vmatprep.subr.mxu0 0.0
  %525 = vmatpush1.msra.mxu0 %v24
  %526 = vmatprep.subr.mxu0 0.0
  %527 = vmatpush1.msra.mxu0 %v23
  %528 = vmatprep.subr.mxu0 0.0
  %529 = vmatpush1.msra.mxu0 %v22
  %530 = vmatprep.subr.mxu0 0.0
  %531 = vmatpush2.msra.mxu0 0.0
  %532 = vmatprep.subr.mxu0 0.0
  %533 = vmatpush2.msra.mxu0 0.0
  %534 = vmatprep.subr.mxu0 0.0
  %535 = vmatpush2.msra.mxu0 0.0
  %536 = vmatprep.subr.mxu0 0.0
  %537 = vmatpush2.msra.mxu0 0.0
  %538 = vmatprep.subr.mxu0 0.0
  %539 = vmatpush2.msra.mxu0 0.0
  %540 = vmatprep.subr.mxu0 0.0
  %541 = vmatpush2.msra.mxu0 0.0
  %542 = vmatprep.subr.mxu0 0.0
  %543 = vmatpush2.msra.mxu0 0.0
  %544 = vmatprep.subr.mxu0 0.0
  %545 = vmatpush2.msra.mxu0 0.0
  %546 = vmatprep.subr.mxu0 0.0
  %547 = vmatpush2.msra.mxu0 0.0
  %548 = vmatprep.subr.mxu0 0.0
  %549 = vmatpush2.msra.mxu0 0.0
  %550 = vmatprep.subr.mxu0 0.0
  %551 = vmatpush2.msra.mxu0 0.0
  %552 = vmatprep.subr.mxu0 0.0
  %553 = vmatpush2.msra.mxu0 0.0
  %554 = vmatprep.subr.mxu0 0.0
  %555 = vmatpush2.msra.mxu0 0.0
  %556 = vmatprep.subr.mxu0 0.0
  %557 = vmatpush2.msra.mxu0 0.0
  %558 = vmatprep.subr.mxu0 0.0
  %559 = vmatpush2.msra.mxu0 0.0
  %560 = vmatprep.subr.mxu0 0.0
  %561 = vmatpush2.msra.mxu0 0.0
  %562 = vmatprep.mubr.f32.mxu0 0.0
  %563 = vmatmul.mubr.f32.gmra.mxu0 %v424
  %v564 = vpop.f32.mrf.mxu0
  %v565 = vadd.f32 0.0, %v564
  %v566 = vpop.f32.mrf.mxu0
  %567 = vdwg.mxu0
  %v568 = vadd.f32 %v497, %v565
  %v569 = vtanh.pop %v568
  %570 = vmatprep.subr.mxu0 0.0
  %571 = vmatpush1.msra.mxu0 %v53
  %572 = vmatprep.subr.mxu0 0.0
  %573 = vmatpush1.msra.mxu0 %v52
  %574 = vmatprep.subr.mxu0 0.0
  %575 = vmatpush1.msra.mxu0 %v51
  %576 = vmatprep.subr.mxu0 0.0
  %577 = vmatpush1.msra.mxu0 %v50
  %578 = vmatprep.subr.mxu0 0.0
  %579 = vmatpush1.msra.mxu0 %v49
  %580 = vmatprep.subr.mxu0 0.0
  %581 = vmatpush1.msra.mxu0 %v48
  %582 = vmatprep.subr.mxu0 0.0
  %583 = vmatpush1.msra.mxu0 %v47
  %584 = vmatprep.subr.mxu0 0.0
  %585 = vmatpush1.msra.mxu0 %v46
  %586 = vmatprep.subr.mxu0 0.0
  %587 = vmatpush1.msra.mxu0 %v45
  %588 = vmatprep.subr.mxu0 0.0
  %589 = vmatpush1.msra.mxu0 %v44
  %590 = vmatprep.subr.mxu0 0.0
  %591 = vmatpush1.msra.mxu0 %v43
  %592 = vmatprep.subr.mxu0 0.0
  %593 = vmatpush1.msra.mxu0 %v42
  %594 = vmatprep.subr.mxu0 0.0
  %595 = vmatpush1.msra.mxu0 %v41
  %596 = vmatprep.subr.mxu0 0.0
  %597 = vmatpush1.msra.mxu0 %v40
  %598 = vmatprep.subr.mxu0 0.0
  %599 = vmatpush1.msra.mxu0 %v39
  %600 = vmatprep.subr.mxu0 0.0
  %601 = vmatpush1.msra.mxu0 %v38
  %602 = vmatprep.subr.mxu0 0.0
  %603 = vmatpush2.msra.mxu0 0.0
  %604 = vmatprep.subr.mxu0 0.0
  %605 = vmatpush2.msra.mxu0 0.0
  %606 = vmatprep.subr.mxu0 0.0
  %607 = vmatpush2.msra.mxu0 0.0
  %608 = vmatprep.subr.mxu0 0.0
  %609 = vmatpush2.msra.mxu0 0.0
  %610 = vmatprep.subr.mxu0 0.0
  %611 = vmatpush2.msra.mxu0 0.0
  %612 = vmatprep.subr.mxu0 0.0
  %613 = vmatpush2.msra.mxu0 0.0
  %614 = vmatprep.subr.mxu0 0.0
  %615 = vmatpush2.msra.mxu0 0.0
  %616 = vmatprep.subr.mxu0 0.0
  %617 = vmatpush2.msra.mxu0 0.0
  %618 = vmatprep.subr.mxu0 0.0
  %619 = vmatpush2.msra.mxu0 0.0
  %620 = vmatprep.subr.mxu0 0.0
  %621 = vmatpush2.msra.mxu0 0.0
  %622 = vmatprep.subr.mxu0 0.0
  %623 = vmatpush2.msra.mxu0 0.0
  %624 = vmatprep.subr.mxu0 0.0
  %625 = vmatpush2.msra.mxu0 0.0
  %626 = vmatprep.subr.mxu0 0.0
  %627 = vmatpush2.msra.mxu0 0.0
  %628 = vmatprep.subr.mxu0 0.0
  %629 = vmatpush2.msra.mxu0 0.0
  %630 = vmatprep.subr.mxu0 0.0
  %631 = vmatpush2.msra.mxu0 0.0
  %632 = vmatprep.subr.mxu0 0.0
  %633 = vmatpush2.msra.mxu0 0.0
  %634 = vmatprep.mubr.f32.mxu0 0.0
  %635 = vmatmul.mubr.f32.gmra.mxu0 %v569
  %v636 = vpop.f32.mrf.mxu0
  %v637 = vadd.f32 %v59, %v636
  %v638 = vpop.f32.mrf.mxu0
  %639 = vdwg.mxu0
  %640 = vst [vmem:[%s5 + $0x18] sm:$0xff] %v637
  %s641 = scalar_lea.vmem %s0, 32
  %v642 = vld [vmem:[%s641] sm:$0xff]
  %643 = vmatprep.subr.mxu0 0.0
  %644 = vmatpush1.msra.mxu0 %v37
  %645 = vmatprep.subr.mxu0 0.0
  %646 = vmatpush1.msra.mxu0 %v36
  %647 = vmatprep.subr.mxu0 0.0
  %648 = vmatpush1.msra.mxu0 %v35
  %649 = vmatprep.subr.mxu0 0.0
  %650 = vmatpush1.msra.mxu0 %v34
  %651 = vmatprep.subr.mxu0 0.0
  %652 = vmatpush1.msra.mxu0 %v33
  %653 = vmatprep.subr.mxu0 0.0
  %654 = vmatpush1.msra.mxu0 %v32
  %655 = vmatprep.subr.mxu0 0.0
  %656 = vmatpush1.msra.mxu0 %v31
  %657 = vmatprep.subr.mxu0 0.0
  %658 = vmatpush1.msra.mxu0 %v30
  %659 = vmatprep.subr.mxu0 0.0
  %660 = vmatpush1.msra.mxu0 %v29
  %661 = vmatprep.subr.mxu0 0.0
  %662 = vmatpush1.msra.mxu0 %v28
  %663 = vmatprep.subr.mxu0 0.0
  %664 = vmatpush1.msra.mxu0 %v27
  %665 = vmatprep.subr.mxu0 0.0
  %666 = vmatpush1.msra.mxu0 %v26
  %667 = vmatprep.subr.mxu0 0.0
  %668 = vmatpush1.msra.mxu0 %v25
  %669 = vmatprep.subr.mxu0 0.0
  %670 = vmatpush1.msra.mxu0 %v24
  %671 = vmatprep.subr.mxu0 0.0
  %672 = vmatpush1.msra.mxu0 %v23
  %673 = vmatprep.subr.mxu0 0.0
  %674 = vmatpush1.msra.mxu0 %v22
  %675 = vmatprep.subr.mxu0 0.0
  %676 = vmatpush2.msra.mxu0 0.0
  %677 = vmatprep.subr.mxu0 0.0
  %678 = vmatpush2.msra.mxu0 0.0
  %679 = vmatprep.subr.mxu0 0.0
  %680 = vmatpush2.msra.mxu0 0.0
  %681 = vmatprep.subr.mxu0 0.0
  %682 = vmatpush2.msra.mxu0 0.0
  %683 = vmatprep.subr.mxu0 0.0
  %684 = vmatpush2.msra.mxu0 0.0
  %685 = vmatprep.subr.mxu0 0.0
  %686 = vmatpush2.msra.mxu0 0.0
  %687 = vmatprep.subr.mxu0 0.0
  %688 = vmatpush2.msra.mxu0 0.0
  %689 = vmatprep.subr.mxu0 0.0
  %690 = vmatpush2.msra.mxu0 0.0
  %691 = vmatprep.subr.mxu0 0.0
  %692 = vmatpush2.msra.mxu0 0.0
  %693 = vmatprep.subr.mxu0 0.0
  %694 = vmatpush2.msra.mxu0 0.0
  %695 = vmatprep.subr.mxu0 0.0
  %696 = vmatpush2.msra.mxu0 0.0
  %697 = vmatprep.subr.mxu0 0.0
  %698 = vmatpush2.msra.mxu0 0.0
  %699 = vmatprep.subr.mxu0 0.0
  %700 = vmatpush2.msra.mxu0 0.0
  %701 = vmatprep.subr.mxu0 0.0
  %702 = vmatpush2.msra.mxu0 0.0
  %703 = vmatprep.subr.mxu0 0.0
  %704 = vmatpush2.msra.mxu0 0.0
  %705 = vmatprep.subr.mxu0 0.0
  %706 = vmatpush2.msra.mxu0 0.0
  %707 = vmatprep.mubr.f32.mxu0 0.0
  %708 = vmatmul.mubr.f32.gmra.mxu0 %v569
  %v709 = vpop.f32.mrf.mxu0
  %v710 = vadd.f32 0.0, %v709
  %v711 = vpop.f32.mrf.mxu0
  %712 = vdwg.mxu0
  %v713 = vadd.f32 %v642, %v710
  %v714 = vtanh.pop %v713
  %715 = vmatprep.subr.mxu0 0.0
  %716 = vmatpush1.msra.mxu0 %v53
  %717 = vmatprep.subr.mxu0 0.0
  %718 = vmatpush1.msra.mxu0 %v52
  %719 = vmatprep.subr.mxu0 0.0
  %720 = vmatpush1.msra.mxu0 %v51
  %721 = vmatprep.subr.mxu0 0.0
  %722 = vmatpush1.msra.mxu0 %v50
  %723 = vmatprep.subr.mxu0 0.0
  %724 = vmatpush1.msra.mxu0 %v49
  %725 = vmatprep.subr.mxu0 0.0
  %726 = vmatpush1.msra.mxu0 %v48
  %727 = vmatprep.subr.mxu0 0.0
  %728 = vmatpush1.msra.mxu0 %v47
  %729 = vmatprep.subr.mxu0 0.0
  %730 = vmatpush1.msra.mxu0 %v46
  %731 = vmatprep.subr.mxu0 0.0
  %732 = vmatpush1.msra.mxu0 %v45
  %733 = vmatprep.subr.mxu0 0.0
  %734 = vmatpush1.msra.mxu0 %v44
  %735 = vmatprep.subr.mxu0 0.0
  %736 = vmatpush1.msra.mxu0 %v43
  %737 = vmatprep.subr.mxu0 0.0
  %738 = vmatpush1.msra.mxu0 %v42
  %739 = vmatprep.subr.mxu0 0.0
  %740 = vmatpush1.msra.mxu0 %v41
  %741 = vmatprep.subr.mxu0 0.0
  %742 = vmatpush1.msra.mxu0 %v40
  %743 = vmatprep.subr.mxu0 0.0
  %744 = vmatpush1.msra.mxu0 %v39
  %745 = vmatprep.subr.mxu0 0.0
  %746 = vmatpush1.msra.mxu0 %v38
  %747 = vmatprep.subr.mxu0 0.0
  %748 = vmatpush2.msra.mxu0 0.0
  %749 = vmatprep.subr.mxu0 0.0
  %750 = vmatpush2.msra.mxu0 0.0
  %751 = vmatprep.subr.mxu0 0.0
  %752 = vmatpush2.msra.mxu0 0.0
  %753 = vmatprep.subr.mxu0 0.0
  %754 = vmatpush2.msra.mxu0 0.0
  %755 = vmatprep.subr.mxu0 0.0
  %756 = vmatpush2.msra.mxu0 0.0
  %757 = vmatprep.subr.mxu0 0.0
  %758 = vmatpush2.msra.mxu0 0.0
  %759 = vmatprep.subr.mxu0 0.0
  %760 = vmatpush2.msra.mxu0 0.0
  %761 = vmatprep.subr.mxu0 0.0
  %762 = vmatpush2.msra.mxu0 0.0
  %763 = vmatprep.subr.mxu0 0.0
  %764 = vmatpush2.msra.mxu0 0.0
  %765 = vmatprep.subr.mxu0 0.0
  %766 = vmatpush2.msra.mxu0 0.0
  %767 = vmatprep.subr.mxu0 0.0
  %768 = vmatpush2.msra.mxu0 0.0
  %769 = vmatprep.subr.mxu0 0.0
  %770 = vmatpush2.msra.mxu0 0.0
  %771 = vmatprep.subr.mxu0 0.0
  %772 = vmatpush2.msra.mxu0 0.0
  %773 = vmatprep.subr.mxu0 0.0
  %774 = vmatpush2.msra.mxu0 0.0
  %775 = vmatprep.subr.mxu0 0.0
  %776 = vmatpush2.msra.mxu0 0.0
  %777 = vmatprep.subr.mxu0 0.0
  %778 = vmatpush2.msra.mxu0 0.0
  %779 = vmatprep.mubr.f32.mxu0 0.0
  %780 = vmatmul.mubr.f32.gmra.mxu0 %v714
  %v781 = vpop.f32.mrf.mxu0
  %v782 = vadd.f32 %v59, %v781
  %v783 = vpop.f32.mrf.mxu0
  %784 = vdwg.mxu0
  %785 = vst [vmem:[%s5 + $0x20] sm:$0xff] %v782
  %s786 = scalar_lea.vmem %s0, 40
  %v787 = vld [vmem:[%s786] sm:$0xff]
  %788 = vmatprep.subr.mxu0 0.0
  %789 = vmatpush1.msra.mxu0 %v37
  %790 = vmatprep.subr.mxu0 0.0
  %791 = vmatpush1.msra.mxu0 %v36
  %792 = vmatprep.subr.mxu0 0.0
  %793 = vmatpush1.msra.mxu0 %v35
  %794 = vmatprep.subr.mxu0 0.0
  %795 = vmatpush1.msra.mxu0 %v34
  %796 = vmatprep.subr.mxu0 0.0
  %797 = vmatpush1.msra.mxu0 %v33
  %798 = vmatprep.subr.mxu0 0.0
  %799 = vmatpush1.msra.mxu0 %v32
  %800 = vmatprep.subr.mxu0 0.0
  %801 = vmatpush1.msra.mxu0 %v31
  %802 = vmatprep.subr.mxu0 0.0
  %803 = vmatpush1.msra.mxu0 %v30
  %804 = vmatprep.subr.mxu0 0.0
  %805 = vmatpush1.msra.mxu0 %v29
  %806 = vmatprep.subr.mxu0 0.0
  %807 = vmatpush1.msra.mxu0 %v28
  %808 = vmatprep.subr.mxu0 0.0
  %809 = vmatpush1.msra.mxu0 %v27
  %810 = vmatprep.subr.mxu0 0.0
  %811 = vmatpush1.msra.mxu0 %v26
  %812 = vmatprep.subr.mxu0 0.0
  %813 = vmatpush1.msra.mxu0 %v25
  %814 = vmatprep.subr.mxu0 0.0
  %815 = vmatpush1.msra.mxu0 %v24
  %816 = vmatprep.subr.mxu0 0.0
  %817 = vmatpush1.msra.mxu0 %v23
  %818 = vmatprep.subr.mxu0 0.0
  %819 = vmatpush1.msra.mxu0 %v22
  %820 = vmatprep.subr.mxu0 0.0
  %821 = vmatpush2.msra.mxu0 0.0
  %822 = vmatprep.subr.mxu0 0.0
  %823 = vmatpush2.msra.mxu0 0.0
  %824 = vmatprep.subr.mxu0 0.0
  %825 = vmatpush2.msra.mxu0 0.0
  %826 = vmatprep.subr.mxu0 0.0
  %827 = vmatpush2.msra.mxu0 0.0
  %828 = vmatprep.subr.mxu0 0.0
  %829 = vmatpush2.msra.mxu0 0.0
  %830 = vmatprep.subr.mxu0 0.0
  %831 = vmatpush2.msra.mxu0 0.0
  %832 = vmatprep.subr.mxu0 0.0
  %833 = vmatpush2.msra.mxu0 0.0
  %834 = vmatprep.subr.mxu0 0.0
  %835 = vmatpush2.msra.mxu0 0.0
  %836 = vmatprep.subr.mxu0 0.0
  %837 = vmatpush2.msra.mxu0 0.0
  %838 = vmatprep.subr.mxu0 0.0
  %839 = vmatpush2.msra.mxu0 0.0
  %840 = vmatprep.subr.mxu0 0.0
  %841 = vmatpush2.msra.mxu0 0.0
  %842 = vmatprep.subr.mxu0 0.0
  %843 = vmatpush2.msra.mxu0 0.0
  %844 = vmatprep.subr.mxu0 0.0
  %845 = vmatpush2.msra.mxu0 0.0
  %846 = vmatprep.subr.mxu0 0.0
  %847 = vmatpush2.msra.mxu0 0.0
  %848 = vmatprep.subr.mxu0 0.0
  %849 = vmatpush2.msra.mxu0 0.0
  %850 = vmatprep.subr.mxu0 0.0
  %851 = vmatpush2.msra.mxu0 0.0
  %852 = vmatprep.mubr.f32.mxu0 0.0
  %853 = vmatmul.mubr.f32.gmra.mxu0 %v714
  %v854 = vpop.f32.mrf.mxu0
  %v855 = vadd.f32 0.0, %v854
  %v856 = vpop.f32.mrf.mxu0
  %857 = vdwg.mxu0
  %v858 = vadd.f32 %v787, %v855
  %v859 = vtanh.pop %v858
  %860 = vmatprep.subr.mxu0 0.0
  %861 = vmatpush1.msra.mxu0 %v53
  %862 = vmatprep.subr.mxu0 0.0
  %863 = vmatpush1.msra.mxu0 %v52
  %864 = vmatprep.subr.mxu0 0.0
  %865 = vmatpush1.msra.mxu0 %v51
  %866 = vmatprep.subr.mxu0 0.0
  %867 = vmatpush1.msra.mxu0 %v50
  %868 = vmatprep.subr.mxu0 0.0
  %869 = vmatpush1.msra.mxu0 %v49
  %870 = vmatprep.subr.mxu0 0.0
  %871 = vmatpush1.msra.mxu0 %v48
  %872 = vmatprep.subr.mxu0 0.0
  %873 = vmatpush1.msra.mxu0 %v47
  %874 = vmatprep.subr.mxu0 0.0
  %875 = vmatpush1.msra.mxu0 %v46
  %876 = vmatprep.subr.mxu0 0.0
  %877 = vmatpush1.msra.mxu0 %v45
  %878 = vmatprep.subr.mxu0 0.0
  %879 = vmatpush1.msra.mxu0 %v44
  %880 = vmatprep.subr.mxu0 0.0
  %881 = vmatpush1.msra.mxu0 %v43
  %882 = vmatprep.subr.mxu0 0.0
  %883 = vmatpush1.msra.mxu0 %v42
  %884 = vmatprep.subr.mxu0 0.0
  %885 = vmatpush1.msra.mxu0 %v41
  %886 = vmatprep.subr.mxu0 0.0
  %887 = vmatpush1.msra.mxu0 %v40
  %888 = vmatprep.subr.mxu0 0.0
  %889 = vmatpush1.msra.mxu0 %v39
  %890 = vmatprep.subr.mxu0 0.0
  %891 = vmatpush1.msra.mxu0 %v38
  %892 = vmatprep.subr.mxu0 0.0
  %893 = vmatpush2.msra.mxu0 0.0
  %894 = vmatprep.subr.mxu0 0.0
  %895 = vmatpush2.msra.mxu0 0.0
  %896 = vmatprep.subr.mxu0 0.0
  %897 = vmatpush2.msra.mxu0 0.0
  %898 = vmatprep.subr.mxu0 0.0
  %899 = vmatpush2.msra.mxu0 0.0
  %900 = vmatprep.subr.mxu0 0.0
  %901 = vmatpush2.msra.mxu0 0.0
  %902 = vmatprep.subr.mxu0 0.0
  %903 = vmatpush2.msra.mxu0 0.0
  %904 = vmatprep.subr.mxu0 0.0
  %905 = vmatpush2.msra.mxu0 0.0
  %906 = vmatprep.subr.mxu0 0.0
  %907 = vmatpush2.msra.mxu0 0.0
  %908 = vmatprep.subr.mxu0 0.0
  %909 = vmatpush2.msra.mxu0 0.0
  %910 = vmatprep.subr.mxu0 0.0
  %911 = vmatpush2.msra.mxu0 0.0
  %912 = vmatprep.subr.mxu0 0.0
  %913 = vmatpush2.msra.mxu0 0.0
  %914 = vmatprep.subr.mxu0 0.0
  %915 = vmatpush2.msra.mxu0 0.0
  %916 = vmatprep.subr.mxu0 0.0
  %917 = vmatpush2.msra.mxu0 0.0
  %918 = vmatprep.subr.mxu0 0.0
  %919 = vmatpush2.msra.mxu0 0.0
  %920 = vmatprep.subr.mxu0 0.0
  %921 = vmatpush2.msra.mxu0 0.0
  %922 = vmatprep.subr.mxu0 0.0
  %923 = vmatpush2.msra.mxu0 0.0
  %924 = vmatprep.mubr.f32.mxu0 0.0
  %925 = vmatmul.mubr.f32.gmra.mxu0 %v859
  %v926 = vpop.f32.mrf.mxu0
  %v927 = vadd.f32 %v59, %v926
  %v928 = vpop.f32.mrf.mxu0
  %929 = vdwg.mxu0
  %930 = vst [vmem:[%s5 + $0x28] sm:$0xff] %v927
  %s931 = scalar_lea.vmem %s0, 48
  %v932 = vld [vmem:[%s931] sm:$0xff]
  %933 = vmatprep.subr.mxu0 0.0
  %934 = vmatpush1.msra.mxu0 %v37
  %935 = vmatprep.subr.mxu0 0.0
  %936 = vmatpush1.msra.mxu0 %v36
  %937 = vmatprep.subr.mxu0 0.0
  %938 = vmatpush1.msra.mxu0 %v35
  %939 = vmatprep.subr.mxu0 0.0
  %940 = vmatpush1.msra.mxu0 %v34
  %941 = vmatprep.subr.mxu0 0.0
  %942 = vmatpush1.msra.mxu0 %v33
  %943 = vmatprep.subr.mxu0 0.0
  %944 = vmatpush1.msra.mxu0 %v32
  %945 = vmatprep.subr.mxu0 0.0
  %946 = vmatpush1.msra.mxu0 %v31
  %947 = vmatprep.subr.mxu0 0.0
  %948 = vmatpush1.msra.mxu0 %v30
  %949 = vmatprep.subr.mxu0 0.0
  %950 = vmatpush1.msra.mxu0 %v29
  %951 = vmatprep.subr.mxu0 0.0
  %952 = vmatpush1.msra.mxu0 %v28
  %953 = vmatprep.subr.mxu0 0.0
  %954 = vmatpush1.msra.mxu0 %v27
  %955 = vmatprep.subr.mxu0 0.0
  %956 = vmatpush1.msra.mxu0 %v26
  %957 = vmatprep.subr.mxu0 0.0
  %958 = vmatpush1.msra.mxu0 %v25
  %959 = vmatprep.subr.mxu0 0.0
  %960 = vmatpush1.msra.mxu0 %v24
  %961 = vmatprep.subr.mxu0 0.0
  %962 = vmatpush1.msra.mxu0 %v23
  %963 = vmatprep.subr.mxu0 0.0
  %964 = vmatpush1.msra.mxu0 %v22
  %965 = vmatprep.subr.mxu0 0.0
  %966 = vmatpush2.msra.mxu0 0.0
  %967 = vmatprep.subr.mxu0 0.0
  %968 = vmatpush2.msra.mxu0 0.0
  %969 = vmatprep.subr.mxu0 0.0
  %970 = vmatpush2.msra.mxu0 0.0
  %971 = vmatprep.subr.mxu0 0.0
  %972 = vmatpush2.msra.mxu0 0.0
  %973 = vmatprep.subr.mxu0 0.0
  %974 = vmatpush2.msra.mxu0 0.0
  %975 = vmatprep.subr.mxu0 0.0
  %976 = vmatpush2.msra.mxu0 0.0
  %977 = vmatprep.subr.mxu0 0.0
  %978 = vmatpush2.msra.mxu0 0.0
  %979 = vmatprep.subr.mxu0 0.0
  %980 = vmatpush2.msra.mxu0 0.0
  %981 = vmatprep.subr.mxu0 0.0
  %982 = vmatpush2.msra.mxu0 0.0
  %983 = vmatprep.subr.mxu0 0.0
  %984 = vmatpush2.msra.mxu0 0.0
  %985 = vmatprep.subr.mxu0 0.0
  %986 = vmatpush2.msra.mxu0 0.0
  %987 = vmatprep.subr.mxu0 0.0
  %988 = vmatpush2.msra.mxu0 0.0
  %989 = vmatprep.subr.mxu0 0.0
  %990 = vmatpush2.msra.mxu0 0.0
  %991 = vmatprep.subr.mxu0 0.0
  %992 = vmatpush2.msra.mxu0 0.0
  %993 = vmatprep.subr.mxu0 0.0
  %994 = vmatpush2.msra.mxu0 0.0
  %995 = vmatprep.subr.mxu0 0.0
  %996 = vmatpush2.msra.mxu0 0.0
  %997 = vmatprep.mubr.f32.mxu0 0.0
  %998 = vmatmul.mubr.f32.gmra.mxu0 %v859
  %v999 = vpop.f32.mrf.mxu0
  %v1000 = vadd.f32 0.0, %v999
  %v1001 = vpop.f32.mrf.mxu0
  %1002 = vdwg.mxu0
  %v1003 = vadd.f32 %v932, %v1000
  %v1004 = vtanh.pop %v1003
  %1005 = vmatprep.subr.mxu0 0.0
  %1006 = vmatpush1.msra.mxu0 %v53
  %1007 = vmatprep.subr.mxu0 0.0
  %1008 = vmatpush1.msra.mxu0 %v52
  %1009 = vmatprep.subr.mxu0 0.0
  %1010 = vmatpush1.msra.mxu0 %v51
  %1011 = vmatprep.subr.mxu0 0.0
  %1012 = vmatpush1.msra.mxu0 %v50
  %1013 = vmatprep.subr.mxu0 0.0
  %1014 = vmatpush1.msra.mxu0 %v49
  %1015 = vmatprep.subr.mxu0 0.0
  %1016 = vmatpush1.msra.mxu0 %v48
  %1017 = vmatprep.subr.mxu0 0.0
  %1018 = vmatpush1.msra.mxu0 %v47
  %1019 = vmatprep.subr.mxu0 0.0
  %1020 = vmatpush1.msra.mxu0 %v46
  %1021 = vmatprep.subr.mxu0 0.0
  %1022 = vmatpush1.msra.mxu0 %v45
  %1023 = vmatprep.subr.mxu0 0.0
  %1024 = vmatpush1.msra.mxu0 %v44
  %1025 = vmatprep.subr.mxu0 0.0
  %1026 = vmatpush1.msra.mxu0 %v43
  %1027 = vmatprep.subr.mxu0 0.0
  %1028 = vmatpush1.msra.mxu0 %v42
  %1029 = vmatprep.subr.mxu0 0.0
  %1030 = vmatpush1.msra.mxu0 %v41
  %1031 = vmatprep.subr.mxu0 0.0
  %1032 = vmatpush1.msra.mxu0 %v40
  %1033 = vmatprep.subr.mxu0 0.0
  %1034 = vmatpush1.msra.mxu0 %v39
  %1035 = vmatprep.subr.mxu0 0.0
  %1036 = vmatpush1.msra.mxu0 %v38
  %1037 = vmatprep.subr.mxu0 0.0
  %1038 = vmatpush2.msra.mxu0 0.0
  %1039 = vmatprep.subr.mxu0 0.0
  %1040 = vmatpush2.msra.mxu0 0.0
  %1041 = vmatprep.subr.mxu0 0.0
  %1042 = vmatpush2.msra.mxu0 0.0
  %1043 = vmatprep.subr.mxu0 0.0
  %1044 = vmatpush2.msra.mxu0 0.0
  %1045 = vmatprep.subr.mxu0 0.0
  %1046 = vmatpush2.msra.mxu0 0.0
  %1047 = vmatprep.subr.mxu0 0.0
  %1048 = vmatpush2.msra.mxu0 0.0
  %1049 = vmatprep.subr.mxu0 0.0
  %1050 = vmatpush2.msra.mxu0 0.0
  %1051 = vmatprep.subr.mxu0 0.0
  %1052 = vmatpush2.msra.mxu0 0.0
  %1053 = vmatprep.subr.mxu0 0.0
  %1054 = vmatpush2.msra.mxu0 0.0
  %1055 = vmatprep.subr.mxu0 0.0
  %1056 = vmatpush2.msra.mxu0 0.0
  %1057 = vmatprep.subr.mxu0 0.0
  %1058 = vmatpush2.msra.mxu0 0.0
  %1059 = vmatprep.subr.mxu0 0.0
  %1060 = vmatpush2.msra.mxu0 0.0
  %1061 = vmatprep.subr.mxu0 0.0
  %1062 = vmatpush2.msra.mxu0 0.0
  %1063 = vmatprep.subr.mxu0 0.0
  %1064 = vmatpush2.msra.mxu0 0.0
  %1065 = vmatprep.subr.mxu0 0.0
  %1066 = vmatpush2.msra.mxu0 0.0
  %1067 = vmatprep.subr.mxu0 0.0
  %1068 = vmatpush2.msra.mxu0 0.0
  %1069 = vmatprep.mubr.f32.mxu0 0.0
  %1070 = vmatmul.mubr.f32.gmra.mxu0 %v1004
  %v1071 = vpop.f32.mrf.mxu0
  %v1072 = vadd.f32 %v59, %v1071
  %v1073 = vpop.f32.mrf.mxu0
  %1074 = vdwg.mxu0
  %1075 = vst [vmem:[%s5 + $0x30] sm:$0xff] %v1072
  %s1076 = scalar_lea.vmem %s0, 56
  %v1077 = vld [vmem:[%s1076] sm:$0xff]
  %1078 = vmatprep.subr.mxu0 0.0
  %1079 = vmatpush1.msra.mxu0 %v37
  %1080 = vmatprep.subr.mxu0 0.0
  %1081 = vmatpush1.msra.mxu0 %v36
  %1082 = vmatprep.subr.mxu0 0.0
  %1083 = vmatpush1.msra.mxu0 %v35
  %1084 = vmatprep.subr.mxu0 0.0
  %1085 = vmatpush1.msra.mxu0 %v34
  %1086 = vmatprep.subr.mxu0 0.0
  %1087 = vmatpush1.msra.mxu0 %v33
  %1088 = vmatprep.subr.mxu0 0.0
  %1089 = vmatpush1.msra.mxu0 %v32
  %1090 = vmatprep.subr.mxu0 0.0
  %1091 = vmatpush1.msra.mxu0 %v31
  %1092 = vmatprep.subr.mxu0 0.0
  %1093 = vmatpush1.msra.mxu0 %v30
  %1094 = vmatprep.subr.mxu0 0.0
  %1095 = vmatpush1.msra.mxu0 %v29
  %1096 = vmatprep.subr.mxu0 0.0
  %1097 = vmatpush1.msra.mxu0 %v28
  %1098 = vmatprep.subr.mxu0 0.0
  %1099 = vmatpush1.msra.mxu0 %v27
  %1100 = vmatprep.subr.mxu0 0.0
  %1101 = vmatpush1.msra.mxu0 %v26
  %1102 = vmatprep.subr.mxu0 0.0
  %1103 = vmatpush1.msra.mxu0 %v25
  %1104 = vmatprep.subr.mxu0 0.0
  %1105 = vmatpush1.msra.mxu0 %v24
  %1106 = vmatprep.subr.mxu0 0.0
  %1107 = vmatpush1.msra.mxu0 %v23
  %1108 = vmatprep.subr.mxu0 0.0
  %1109 = vmatpush1.msra.mxu0 %v22
  %1110 = vmatprep.subr.mxu0 0.0
  %1111 = vmatpush2.msra.mxu0 0.0
  %1112 = vmatprep.subr.mxu0 0.0
  %1113 = vmatpush2.msra.mxu0 0.0
  %1114 = vmatprep.subr.mxu0 0.0
  %1115 = vmatpush2.msra.mxu0 0.0
  %1116 = vmatprep.subr.mxu0 0.0
  %1117 = vmatpush2.msra.mxu0 0.0
  %1118 = vmatprep.subr.mxu0 0.0
  %1119 = vmatpush2.msra.mxu0 0.0
  %1120 = vmatprep.subr.mxu0 0.0
  %1121 = vmatpush2.msra.mxu0 0.0
  %1122 = vmatprep.subr.mxu0 0.0
  %1123 = vmatpush2.msra.mxu0 0.0
  %1124 = vmatprep.subr.mxu0 0.0
  %1125 = vmatpush2.msra.mxu0 0.0
  %1126 = vmatprep.subr.mxu0 0.0
  %1127 = vmatpush2.msra.mxu0 0.0
  %1128 = vmatprep.subr.mxu0 0.0
  %1129 = vmatpush2.msra.mxu0 0.0
  %1130 = vmatprep.subr.mxu0 0.0
  %1131 = vmatpush2.msra.mxu0 0.0
  %1132 = vmatprep.subr.mxu0 0.0
  %1133 = vmatpush2.msra.mxu0 0.0
  %1134 = vmatprep.subr.mxu0 0.0
  %1135 = vmatpush2.msra.mxu0 0.0
  %1136 = vmatprep.subr.mxu0 0.0
  %1137 = vmatpush2.msra.mxu0 0.0
  %1138 = vmatprep.subr.mxu0 0.0
  %1139 = vmatpush2.msra.mxu0 0.0
  %1140 = vmatprep.subr.mxu0 0.0
  %1141 = vmatpush2.msra.mxu0 0.0
  %1142 = vmatprep.mubr.f32.mxu0 0.0
  %1143 = vmatmul.mubr.f32.gmra.mxu0 %v1004
  %v1144 = vpop.f32.mrf.mxu0
  %v1145 = vadd.f32 0.0, %v1144
  %v1146 = vpop.f32.mrf.mxu0
  %1147 = vdwg.mxu0
  %v1148 = vadd.f32 %v1077, %v1145
  %v1149 = vtanh.pop %v1148
  %1150 = vmatprep.subr.mxu0 0.0
  %1151 = vmatpush1.msra.mxu0 %v53
  %1152 = vmatprep.subr.mxu0 0.0
  %1153 = vmatpush1.msra.mxu0 %v52
  %1154 = vmatprep.subr.mxu0 0.0
  %1155 = vmatpush1.msra.mxu0 %v51
  %1156 = vmatprep.subr.mxu0 0.0
  %1157 = vmatpush1.msra.mxu0 %v50
  %1158 = vmatprep.subr.mxu0 0.0
  %1159 = vmatpush1.msra.mxu0 %v49
  %1160 = vmatprep.subr.mxu0 0.0
  %1161 = vmatpush1.msra.mxu0 %v48
  %1162 = vmatprep.subr.mxu0 0.0
  %1163 = vmatpush1.msra.mxu0 %v47
  %1164 = vmatprep.subr.mxu0 0.0
  %1165 = vmatpush1.msra.mxu0 %v46
  %1166 = vmatprep.subr.mxu0 0.0
  %1167 = vmatpush1.msra.mxu0 %v45
  %1168 = vmatprep.subr.mxu0 0.0
  %1169 = vmatpush1.msra.mxu0 %v44
  %1170 = vmatprep.subr.mxu0 0.0
  %1171 = vmatpush1.msra.mxu0 %v43
  %1172 = vmatprep.subr.mxu0 0.0
  %1173 = vmatpush1.msra.mxu0 %v42
  %1174 = vmatprep.subr.mxu0 0.0
  %1175 = vmatpush1.msra.mxu0 %v41
  %1176 = vmatprep.subr.mxu0 0.0
  %1177 = vmatpush1.msra.mxu0 %v40
  %1178 = vmatprep.subr.mxu0 0.0
  %1179 = vmatpush1.msra.mxu0 %v39
  %1180 = vmatprep.subr.mxu0 0.0
  %1181 = vmatpush1.msra.mxu0 %v38
  %1182 = vmatprep.subr.mxu0 0.0
  %1183 = vmatpush2.msra.mxu0 0.0
  %1184 = vmatprep.subr.mxu0 0.0
  %1185 = vmatpush2.msra.mxu0 0.0
  %1186 = vmatprep.subr.mxu0 0.0
  %1187 = vmatpush2.msra.mxu0 0.0
  %1188 = vmatprep.subr.mxu0 0.0
  %1189 = vmatpush2.msra.mxu0 0.0
  %1190 = vmatprep.subr.mxu0 0.0
  %1191 = vmatpush2.msra.mxu0 0.0
  %1192 = vmatprep.subr.mxu0 0.0
  %1193 = vmatpush2.msra.mxu0 0.0
  %1194 = vmatprep.subr.mxu0 0.0
  %1195 = vmatpush2.msra.mxu0 0.0
  %1196 = vmatprep.subr.mxu0 0.0
  %1197 = vmatpush2.msra.mxu0 0.0
  %1198 = vmatprep.subr.mxu0 0.0
  %1199 = vmatpush2.msra.mxu0 0.0
  %1200 = vmatprep.subr.mxu0 0.0
  %1201 = vmatpush2.msra.mxu0 0.0
  %1202 = vmatprep.subr.mxu0 0.0
  %1203 = vmatpush2.msra.mxu0 0.0
  %1204 = vmatprep.subr.mxu0 0.0
  %1205 = vmatpush2.msra.mxu0 0.0
  %1206 = vmatprep.subr.mxu0 0.0
  %1207 = vmatpush2.msra.mxu0 0.0
  %1208 = vmatprep.subr.mxu0 0.0
  %1209 = vmatpush2.msra.mxu0 0.0
  %1210 = vmatprep.subr.mxu0 0.0
  %1211 = vmatpush2.msra.mxu0 0.0
  %1212 = vmatprep.subr.mxu0 0.0
  %1213 = vmatpush2.msra.mxu0 0.0
  %1214 = vmatprep.mubr.f32.mxu0 0.0
  %1215 = vmatmul.mubr.f32.gmra.mxu0 %v1149
  %v1216 = vpop.f32.mrf.mxu0
  %v1217 = vadd.f32 %v59, %v1216
  %v1218 = vpop.f32.mrf.mxu0
  %1219 = vdwg.mxu0
  %1220 = vst [vmem:[%s5 + $0x38] sm:$0xff] %v1217
  %1221 = vst [vmem:[%s6] sm:$0xff] %v1149
  // Predicated region
  $region22: #{rnn_model_forward.1} parent=0 // pred_check
    _
  $region23: #{rnn_model_forward.1} parent=0 // pred_check_branch
    %1223 = sbr.rel (0) target = $region25
  $region24: #{rnn_model_forward.1} parent=0 // pred_region
    _
  $region25: #{rnn_model_forward.1} parent=0 // pred_fallthru
    _
  // Predicated region
  $region26: #{rnn_model_forward.1} parent=0 // pred_check
    _
  $region27: #{rnn_model_forward.1} parent=0 // pred_check_branch
    %1225 = sbr.rel (0) target = $region29
  $region28: #{rnn_model_forward.1} parent=0 // pred_region
    _
  $region29: #{rnn_model_forward.1} parent=0 // pred_fallthru
    _
  // Predicated region
  $region30: #{rnn_model_forward.1} parent=0 // pred_check
    _
  $region31: #{rnn_model_forward.1} parent=0 // pred_check_branch
    %1227 = sbr.rel (0) target = $region33
  $region32: #{rnn_model_forward.1} parent=0 // pred_region
    _
  $region33: #{rnn_model_forward.1} parent=0 // pred_fallthru
    _
  // Predicated region
  $region34: #{rnn_model_forward.1} parent=0 // pred_check
    _
  $region35: #{rnn_model_forward.1} parent=0 // pred_check_branch
    %1229 = sbr.rel (0) target = $region37
  $region36: #{rnn_model_forward.1} parent=0 // pred_region
    _
  $region37: #{rnn_model_forward.1} parent=0 // pred_fallthru
    _

</llo_original>
